<compile_context>
chip_gen: v7x
topology: tpu7x:2x2x1
jax: 0.10.0
libtpu: 0.0.40
codegen_flags: <defaults>
</compile_context>

<pallas_src>
import functools

import jax
import jax.numpy as jnp
from jax import lax
from jax.experimental import pallas as pl
from jax.experimental.pallas import tpu as pltpu


def _topk_act_kernel(x_ref, o_ref, *, k, chunk_cols):
    """x_ref/o_ref: (nneurons, tile_cols) block; neurons on sublanes, batch on lanes."""
    n, tc = x_ref.shape
    num_chunks = tc // chunk_cols
    kf = float(k)

    def process(col):
        # ReLU'd chunk, (n, chunk_cols).  All values >= 0 after this.
        x = jnp.maximum(x_ref[:, pl.ds(col, chunk_cols)], 0.0)

        # Peel the per-column maximum k times.  Each iteration removes *all*
        # occurrences of the current max (sentinel -1.0); `removed` counts how many
        # elements were already peeled, so the k-th largest (ties counted, matching
        # torch.topk semantics) is the last max recorded while removed < k.
        def peel(_, st):
            w, kth = st
            # kept entries are >= 0, removed entries are exactly -1.0
            removed = -jnp.sum(jnp.minimum(w, 0.0), axis=0, keepdims=True)  # (1, cc)
            m = jnp.max(w, axis=0, keepdims=True)                           # (1, cc)
            kth = jnp.where(removed < kf, m, kth)
            w = jnp.where(w == m, -1.0, w)
            return w, kth

        _, kth = lax.fori_loop(
            0, k, peel, (x, jnp.zeros((1, chunk_cols), x.dtype)), unroll=True)

        # Default branch of the module: gaba_response == 1  ->  relu(x - inhib)
        o_ref[:, pl.ds(col, chunk_cols)] = jnp.maximum(x - kth, 0.0)

    if num_chunks == 1:
        process(0)
    else:
        @pl.loop(0, num_chunks)
        def _(c):
            process(pl.multiple_of(c * chunk_cols, chunk_cols))
    # TODO(synk): GABA_SWITCH / LEARN_K_SIGMOID / LEARN_K_REINFORCE / MASK branches
    # (stateful counters, learned-k sampling, scatter masks, wandb logging) are not
    # implemented here.


def _pick_tile_cols(b, target):
    """Batch columns per grid step: big tiles, but keep >=4 grid steps (v7x megacore
    / pipelining) when the batch allows it; fall back to a single full-width block
    when the batch is tiny or not 128-divisible."""
    if b <= 128 or b % 128 != 0:
        return b
    cap = max(128, min(target, (b // 4) // 128 * 128))
    tc = (cap // 128) * 128
    while tc > 128 and b % tc != 0:
        tc -= 128
    return tc


def top_k_act(x, k, *, tile_cols=1024):
    """x: (batch, nneurons) float; k: static python int (current k of the schedule)."""
    b, n = x.shape
    k = int(k)
    assert 1 <= k <= n, "k must satisfy 1 <= k <= nneurons"

    # Transpose so neurons sit on the sublane axis and batch on the lane axis:
    # per-sample reductions become VPU work instead of cross-lane XLU reductions.
    xt = x.T                                   # (n, b)

    tc = _pick_tile_cols(b, tile_cols)
    chunk_cols = 128 if tc % 128 == 0 else tc  # inner chunk bounds vreg live range
    grid = (b // tc,)

    kernel = functools.partial(_topk_act_kernel, k=k, chunk_cols=chunk_cols)

    # 2x double-buffered input + output blocks; raise the scoped VMEM limit for
    # large tiles (v5e default is only 16 MiB) but stay well under v7x's 64 MiB.
    vmem_need = 4 * n * tc * x.dtype.itemsize
    vmem_limit = int(min(max(2 * vmem_need, 32 * 2**20), 48 * 2**20))

    out_t = pl.pallas_call(
        kernel,
        out_shape=jax.ShapeDtypeStruct((n, b), x.dtype),
        grid_spec=pl.GridSpec(
            grid=grid,
            in_specs=[pl.BlockSpec((n, tc), lambda i: (0, i))],
            out_specs=pl.BlockSpec((n, tc), lambda i: (0, i)),
        ),
        compiler_params=pltpu.CompilerParams(
            dimension_semantics=("parallel",),
            vmem_limit_bytes=vmem_limit,
        ),
    )(xt)
    return out_t.T


def top_k_act_ref(x, k):
    """Pure-JAX reference mirroring the PyTorch forward (default branch)."""
    xr = jnp.maximum(x, 0.0)
    thr = jnp.sort(xr, axis=1)[:, xr.shape[1] - k][:, None]   # k-th largest per row
    return jnp.maximum(xr - thr, 0.0)


if __name__ == "__main__":
    nneurons, k_min = 128, 16                       # params.k_min = 16
    key0, key1 = jax.random.split(jax.random.PRNGKey(0))

    # Case 1: moderate batch -> multi-step grid (4 steps) + inner column chunking.
    x1 = jax.random.normal(key0, (1024, nneurons), dtype=jnp.float32)
    out1 = jax.block_until_ready(top_k_act(x1, k_min))
    ref1 = top_k_act_ref(x1, k_min)
    assert out1.shape == x1.shape
    assert jnp.allclose(out1, ref1, atol=1e-6), "mismatch vs reference (batch=1024)"

    # Case 2: tiny batch (original toy shape) -> single full-width block.
    x2 = jax.random.normal(key1, (8, nneurons), dtype=jnp.float32)
    out2 = jax.block_until_ready(top_k_act(x2, k_min))
    ref2 = top_k_act_ref(x2, k_min)
    assert jnp.allclose(out2, ref2, atol=1e-6), "mismatch vs reference (batch=8)"

    print("KERNEL_OK")
</pallas_src>

<mosaic_0001>
module attributes {stable_mosaic.version = 11 : i64} {
  func.func @_topk_act_kernel(%arg0: i32, %arg1: memref<128x256xf32, #tpu.memory_space<vmem>>, %arg2: memref<128x256xf32, #tpu.memory_space<vmem>>) attributes {dimension_semantics = [#tpu.dimension_semantics<parallel>], iteration_bounds = array<i64: 4>, scalar_prefetch = 0 : i64, scratch_operands = 0 : i64, tpu.core_type = #tpu.core_type<tc>, window_params = [{transform_indices = @transform_0, window_bounds = array<i64: 128, 256>}, {transform_indices = @transform_1, window_bounds = array<i64: 128, 256>}]} {
    %c0_i32 = arith.constant 0 : i32
    %c2_i32 = arith.constant 2 : i32
    %0 = arith.addi %c0_i32, %c2_i32 : i32
    %c1_i32 = arith.constant 1 : i32
    scf.for %arg3 = %c0_i32 to %0 step %c1_i32  : i32 {
      %c1_i32_1 = arith.constant 1 : i32
      %1 = arith.muli %arg3, %c1_i32_1 : i32
      %c0_i32_2 = arith.constant 0 : i32
      %2 = arith.addi %c0_i32_2, %1 : i32
      %c128_i32 = arith.constant 128 : i32
      %3 = arith.muli %2, %c128_i32 : i32
      %4 = tpu.assume_multiple %3, 128 : i32
      %c0 = arith.constant 0 : index
      %5 = arith.index_cast %4 : i32 to index
      %6 = vector.load %arg1[%c0, %5] : memref<128x256xf32, #tpu.memory_space<vmem>>, vector<128x128xf32>
      %cst = arith.constant 0.000000e+00 : f32
      %7 = vector.broadcast %cst : f32 to vector<128x128xf32>
      %8 = arith.maximumf %6, %7 : vector<128x128xf32>
      %cst_3 = arith.constant 0.000000e+00 : f32
      %9 = vector.broadcast %cst_3 : f32 to vector<1x128xf32>
      %c0_i32_4 = arith.constant 0 : i32
      %cst_5 = arith.constant 0.000000e+00 : f32
      %10 = vector.broadcast %cst_5 : f32 to vector<128x128xf32>
      %11 = arith.minimumf %8, %10 : vector<128x128xf32>
      %cst_6 = arith.constant dense<0.000000e+00> : vector<128xf32>
      %12 = vector.multi_reduction <add>, %11, %cst_6 [0] : vector<128x128xf32> to vector<128xf32>
      %13 = vector.shape_cast %12 : vector<128xf32> to vector<1x128xf32>
      %cst_7 = arith.constant 0.000000e+00 : f32
      %14 = vector.broadcast %cst_7 : f32 to vector<1x128xf32>
      %15 = arith.subf %14, %13 : vector<1x128xf32>
      %cst_8 = arith.constant dense<0xFF800000> : vector<128xf32>
      %16 = vector.multi_reduction <maximumf>, %8, %cst_8 [0] : vector<128x128xf32> to vector<128xf32>
      %17 = vector.shape_cast %16 : vector<128xf32> to vector<1x128xf32>
      %cst_9 = arith.constant 1.600000e+01 : f32
      %18 = vector.broadcast %cst_9 : f32 to vector<1x128xf32>
      %19 = arith.cmpf olt, %15, %18 : vector<1x128xf32>
      %20 = arith.select %19, %17, %9 : vector<1x128xi1>, vector<1x128xf32>
      %21 = vector.broadcast %17 : vector<1x128xf32> to vector<128x128xf32>
      %22 = arith.cmpf oeq, %8, %21 : vector<128x128xf32>
      %cst_10 = arith.constant -1.000000e+00 : f32
      %23 = vector.broadcast %cst_10 : f32 to vector<128x128xf32>
      %24 = arith.select %22, %23, %8 : vector<128x128xi1>, vector<128x128xf32>
      %c1_i32_11 = arith.constant 1 : i32
      %cst_12 = arith.constant 0.000000e+00 : f32
      %25 = vector.broadcast %cst_12 : f32 to vector<128x128xf32>
      %26 = arith.minimumf %24, %25 : vector<128x128xf32>
      %cst_13 = arith.constant dense<0.000000e+00> : vector<128xf32>
      %27 = vector.multi_reduction <add>, %26, %cst_13 [0] : vector<128x128xf32> to vector<128xf32>
      %28 = vector.shape_cast %27 : vector<128xf32> to vector<1x128xf32>
      %cst_14 = arith.constant 0.000000e+00 : f32
      %29 = vector.broadcast %cst_14 : f32 to vector<1x128xf32>
      %30 = arith.subf %29, %28 : vector<1x128xf32>
      %cst_15 = arith.constant dense<0xFF800000> : vector<128xf32>
      %31 = vector.multi_reduction <maximumf>, %24, %cst_15 [0] : vector<128x128xf32> to vector<128xf32>
      %32 = vector.shape_cast %31 : vector<128xf32> to vector<1x128xf32>
      %cst_16 = arith.constant 1.600000e+01 : f32
      %33 = vector.broadcast %cst_16 : f32 to vector<1x128xf32>
      %34 = arith.cmpf olt, %30, %33 : vector<1x128xf32>
      %35 = arith.select %34, %32, %20 : vector<1x128xi1>, vector<1x128xf32>
      %36 = vector.broadcast %32 : vector<1x128xf32> to vector<128x128xf32>
      %37 = arith.cmpf oeq, %24, %36 : vector<128x128xf32>
      %cst_17 = arith.constant -1.000000e+00 : f32
      %38 = vector.broadcast %cst_17 : f32 to vector<128x128xf32>
      %39 = arith.select %37, %38, %24 : vector<128x128xi1>, vector<128x128xf32>
      %c2_i32_18 = arith.constant 2 : i32
      %cst_19 = arith.constant 0.000000e+00 : f32
      %40 = vector.broadcast %cst_19 : f32 to vector<128x128xf32>
      %41 = arith.minimumf %39, %40 : vector<128x128xf32>
      %cst_20 = arith.constant dense<0.000000e+00> : vector<128xf32>
      %42 = vector.multi_reduction <add>, %41, %cst_20 [0] : vector<128x128xf32> to vector<128xf32>
      %43 = vector.shape_cast %42 : vector<128xf32> to vector<1x128xf32>
      %cst_21 = arith.constant 0.000000e+00 : f32
      %44 = vector.broadcast %cst_21 : f32 to vector<1x128xf32>
      %45 = arith.subf %44, %43 : vector<1x128xf32>
      %cst_22 = arith.constant dense<0xFF800000> : vector<128xf32>
      %46 = vector.multi_reduction <maximumf>, %39, %cst_22 [0] : vector<128x128xf32> to vector<128xf32>
      %47 = vector.shape_cast %46 : vector<128xf32> to vector<1x128xf32>
      %cst_23 = arith.constant 1.600000e+01 : f32
      %48 = vector.broadcast %cst_23 : f32 to vector<1x128xf32>
      %49 = arith.cmpf olt, %45, %48 : vector<1x128xf32>
      %50 = arith.select %49, %47, %35 : vector<1x128xi1>, vector<1x128xf32>
      %51 = vector.broadcast %47 : vector<1x128xf32> to vector<128x128xf32>
      %52 = arith.cmpf oeq, %39, %51 : vector<128x128xf32>
      %cst_24 = arith.constant -1.000000e+00 : f32
      %53 = vector.broadcast %cst_24 : f32 to vector<128x128xf32>
      %54 = arith.select %52, %53, %39 : vector<128x128xi1>, vector<128x128xf32>
      %c3_i32 = arith.constant 3 : i32
      %cst_25 = arith.constant 0.000000e+00 : f32
      %55 = vector.broadcast %cst_25 : f32 to vector<128x128xf32>
      %56 = arith.minimumf %54, %55 : vector<128x128xf32>
      %cst_26 = arith.constant dense<0.000000e+00> : vector<128xf32>
      %57 = vector.multi_reduction <add>, %56, %cst_26 [0] : vector<128x128xf32> to vector<128xf32>
      %58 = vector.shape_cast %57 : vector<128xf32> to vector<1x128xf32>
      %cst_27 = arith.constant 0.000000e+00 : f32
      %59 = vector.broadcast %cst_27 : f32 to vector<1x128xf32>
      %60 = arith.subf %59, %58 : vector<1x128xf32>
      %cst_28 = arith.constant dense<0xFF800000> : vector<128xf32>
      %61 = vector.multi_reduction <maximumf>, %54, %cst_28 [0] : vector<128x128xf32> to vector<128xf32>
      %62 = vector.shape_cast %61 : vector<128xf32> to vector<1x128xf32>
      %cst_29 = arith.constant 1.600000e+01 : f32
      %63 = vector.broadcast %cst_29 : f32 to vector<1x128xf32>
      %64 = arith.cmpf olt, %60, %63 : vector<1x128xf32>
      %65 = arith.select %64, %62, %50 : vector<1x128xi1>, vector<1x128xf32>
      %66 = vector.broadcast %62 : vector<1x128xf32> to vector<128x128xf32>
      %67 = arith.cmpf oeq, %54, %66 : vector<128x128xf32>
      %cst_30 = arith.constant -1.000000e+00 : f32
      %68 = vector.broadcast %cst_30 : f32 to vector<128x128xf32>
      %69 = arith.select %67, %68, %54 : vector<128x128xi1>, vector<128x128xf32>
      %c4_i32 = arith.constant 4 : i32
      %cst_31 = arith.constant 0.000000e+00 : f32
      %70 = vector.broadcast %cst_31 : f32 to vector<128x128xf32>
      %71 = arith.minimumf %69, %70 : vector<128x128xf32>
      %cst_32 = arith.constant dense<0.000000e+00> : vector<128xf32>
      %72 = vector.multi_reduction <add>, %71, %cst_32 [0] : vector<128x128xf32> to vector<128xf32>
      %73 = vector.shape_cast %72 : vector<128xf32> to vector<1x128xf32>
      %cst_33 = arith.constant 0.000000e+00 : f32
      %74 = vector.broadcast %cst_33 : f32 to vector<1x128xf32>
      %75 = arith.subf %74, %73 : vector<1x128xf32>
      %cst_34 = arith.constant dense<0xFF800000> : vector<128xf32>
      %76 = vector.multi_reduction <maximumf>, %69, %cst_34 [0] : vector<128x128xf32> to vector<128xf32>
      %77 = vector.shape_cast %76 : vector<128xf32> to vector<1x128xf32>
      %cst_35 = arith.constant 1.600000e+01 : f32
      %78 = vector.broadcast %cst_35 : f32 to vector<1x128xf32>
      %79 = arith.cmpf olt, %75, %78 : vector<1x128xf32>
      %80 = arith.select %79, %77, %65 : vector<1x128xi1>, vector<1x128xf32>
      %81 = vector.broadcast %77 : vector<1x128xf32> to vector<128x128xf32>
      %82 = arith.cmpf oeq, %69, %81 : vector<128x128xf32>
      %cst_36 = arith.constant -1.000000e+00 : f32
      %83 = vector.broadcast %cst_36 : f32 to vector<128x128xf32>
      %84 = arith.select %82, %83, %69 : vector<128x128xi1>, vector<128x128xf32>
      %c5_i32 = arith.constant 5 : i32
      %cst_37 = arith.constant 0.000000e+00 : f32
      %85 = vector.broadcast %cst_37 : f32 to vector<128x128xf32>
      %86 = arith.minimumf %84, %85 : vector<128x128xf32>
      %cst_38 = arith.constant dense<0.000000e+00> : vector<128xf32>
      %87 = vector.multi_reduction <add>, %86, %cst_38 [0] : vector<128x128xf32> to vector<128xf32>
      %88 = vector.shape_cast %87 : vector<128xf32> to vector<1x128xf32>
      %cst_39 = arith.constant 0.000000e+00 : f32
      %89 = vector.broadcast %cst_39 : f32 to vector<1x128xf32>
      %90 = arith.subf %89, %88 : vector<1x128xf32>
      %cst_40 = arith.constant dense<0xFF800000> : vector<128xf32>
      %91 = vector.multi_reduction <maximumf>, %84, %cst_40 [0] : vector<128x128xf32> to vector<128xf32>
      %92 = vector.shape_cast %91 : vector<128xf32> to vector<1x128xf32>
      %cst_41 = arith.constant 1.600000e+01 : f32
      %93 = vector.broadcast %cst_41 : f32 to vector<1x128xf32>
      %94 = arith.cmpf olt, %90, %93 : vector<1x128xf32>
      %95 = arith.select %94, %92, %80 : vector<1x128xi1>, vector<1x128xf32>
      %96 = vector.broadcast %92 : vector<1x128xf32> to vector<128x128xf32>
      %97 = arith.cmpf oeq, %84, %96 : vector<128x128xf32>
      %cst_42 = arith.constant -1.000000e+00 : f32
      %98 = vector.broadcast %cst_42 : f32 to vector<128x128xf32>
      %99 = arith.select %97, %98, %84 : vector<128x128xi1>, vector<128x128xf32>
      %c6_i32 = arith.constant 6 : i32
      %cst_43 = arith.constant 0.000000e+00 : f32
      %100 = vector.broadcast %cst_43 : f32 to vector<128x128xf32>
      %101 = arith.minimumf %99, %100 : vector<128x128xf32>
      %cst_44 = arith.constant dense<0.000000e+00> : vector<128xf32>
      %102 = vector.multi_reduction <add>, %101, %cst_44 [0] : vector<128x128xf32> to vector<128xf32>
      %103 = vector.shape_cast %102 : vector<128xf32> to vector<1x128xf32>
      %cst_45 = arith.constant 0.000000e+00 : f32
      %104 = vector.broadcast %cst_45 : f32 to vector<1x128xf32>
      %105 = arith.subf %104, %103 : vector<1x128xf32>
      %cst_46 = arith.constant dense<0xFF800000> : vector<128xf32>
      %106 = vector.multi_reduction <maximumf>, %99, %cst_46 [0] : vector<128x128xf32> to vector<128xf32>
      %107 = vector.shape_cast %106 : vector<128xf32> to vector<1x128xf32>
      %cst_47 = arith.constant 1.600000e+01 : f32
      %108 = vector.broadcast %cst_47 : f32 to vector<1x128xf32>
      %109 = arith.cmpf olt, %105, %108 : vector<1x128xf32>
      %110 = arith.select %109, %107, %95 : vector<1x128xi1>, vector<1x128xf32>
      %111 = vector.broadcast %107 : vector<1x128xf32> to vector<128x128xf32>
      %112 = arith.cmpf oeq, %99, %111 : vector<128x128xf32>
      %cst_48 = arith.constant -1.000000e+00 : f32
      %113 = vector.broadcast %cst_48 : f32 to vector<128x128xf32>
      %114 = arith.select %112, %113, %99 : vector<128x128xi1>, vector<128x128xf32>
      %c7_i32 = arith.constant 7 : i32
      %cst_49 = arith.constant 0.000000e+00 : f32
      %115 = vector.broadcast %cst_49 : f32 to vector<128x128xf32>
      %116 = arith.minimumf %114, %115 : vector<128x128xf32>
      %cst_50 = arith.constant dense<0.000000e+00> : vector<128xf32>
      %117 = vector.multi_reduction <add>, %116, %cst_50 [0] : vector<128x128xf32> to vector<128xf32>
      %118 = vector.shape_cast %117 : vector<128xf32> to vector<1x128xf32>
      %cst_51 = arith.constant 0.000000e+00 : f32
      %119 = vector.broadcast %cst_51 : f32 to vector<1x128xf32>
      %120 = arith.subf %119, %118 : vector<1x128xf32>
      %cst_52 = arith.constant dense<0xFF800000> : vector<128xf32>
      %121 = vector.multi_reduction <maximumf>, %114, %cst_52 [0] : vector<128x128xf32> to vector<128xf32>
      %122 = vector.shape_cast %121 : vector<128xf32> to vector<1x128xf32>
      %cst_53 = arith.constant 1.600000e+01 : f32
      %123 = vector.broadcast %cst_53 : f32 to vector<1x128xf32>
      %124 = arith.cmpf olt, %120, %123 : vector<1x128xf32>
      %125 = arith.select %124, %122, %110 : vector<1x128xi1>, vector<1x128xf32>
      %126 = vector.broadcast %122 : vector<1x128xf32> to vector<128x128xf32>
      %127 = arith.cmpf oeq, %114, %126 : vector<128x128xf32>
      %cst_54 = arith.constant -1.000000e+00 : f32
      %128 = vector.broadcast %cst_54 : f32 to vector<128x128xf32>
      %129 = arith.select %127, %128, %114 : vector<128x128xi1>, vector<128x128xf32>
      %c8_i32 = arith.constant 8 : i32
      %cst_55 = arith.constant 0.000000e+00 : f32
      %130 = vector.broadcast %cst_55 : f32 to vector<128x128xf32>
      %131 = arith.minimumf %129, %130 : vector<128x128xf32>
      %cst_56 = arith.constant dense<0.000000e+00> : vector<128xf32>
      %132 = vector.multi_reduction <add>, %131, %cst_56 [0] : vector<128x128xf32> to vector<128xf32>
      %133 = vector.shape_cast %132 : vector<128xf32> to vector<1x128xf32>
      %cst_57 = arith.constant 0.000000e+00 : f32
      %134 = vector.broadcast %cst_57 : f32 to vector<1x128xf32>
      %135 = arith.subf %134, %133 : vector<1x128xf32>
      %cst_58 = arith.constant dense<0xFF800000> : vector<128xf32>
      %136 = vector.multi_reduction <maximumf>, %129, %cst_58 [0] : vector<128x128xf32> to vector<128xf32>
      %137 = vector.shape_cast %136 : vector<128xf32> to vector<1x128xf32>
      %cst_59 = arith.constant 1.600000e+01 : f32
      %138 = vector.broadcast %cst_59 : f32 to vector<1x128xf32>
      %139 = arith.cmpf olt, %135, %138 : vector<1x128xf32>
      %140 = arith.select %139, %137, %125 : vector<1x128xi1>, vector<1x128xf32>
      %141 = vector.broadcast %137 : vector<1x128xf32> to vector<128x128xf32>
      %142 = arith.cmpf oeq, %129, %141 : vector<128x128xf32>
      %cst_60 = arith.constant -1.000000e+00 : f32
      %143 = vector.broadcast %cst_60 : f32 to vector<128x128xf32>
      %144 = arith.select %142, %143, %129 : vector<128x128xi1>, vector<128x128xf32>
      %c9_i32 = arith.constant 9 : i32
      %cst_61 = arith.constant 0.000000e+00 : f32
      %145 = vector.broadcast %cst_61 : f32 to vector<128x128xf32>
      %146 = arith.minimumf %144, %145 : vector<128x128xf32>
      %cst_62 = arith.constant dense<0.000000e+00> : vector<128xf32>
      %147 = vector.multi_reduction <add>, %146, %cst_62 [0] : vector<128x128xf32> to vector<128xf32>
      %148 = vector.shape_cast %147 : vector<128xf32> to vector<1x128xf32>
      %cst_63 = arith.constant 0.000000e+00 : f32
      %149 = vector.broadcast %cst_63 : f32 to vector<1x128xf32>
      %150 = arith.subf %149, %148 : vector<1x128xf32>
      %cst_64 = arith.constant dense<0xFF800000> : vector<128xf32>
      %151 = vector.multi_reduction <maximumf>, %144, %cst_64 [0] : vector<128x128xf32> to vector<128xf32>
      %152 = vector.shape_cast %151 : vector<128xf32> to vector<1x128xf32>
      %cst_65 = arith.constant 1.600000e+01 : f32
      %153 = vector.broadcast %cst_65 : f32 to vector<1x128xf32>
      %154 = arith.cmpf olt, %150, %153 : vector<1x128xf32>
      %155 = arith.select %154, %152, %140 : vector<1x128xi1>, vector<1x128xf32>
      %156 = vector.broadcast %152 : vector<1x128xf32> to vector<128x128xf32>
      %157 = arith.cmpf oeq, %144, %156 : vector<128x128xf32>
      %cst_66 = arith.constant -1.000000e+00 : f32
      %158 = vector.broadcast %cst_66 : f32 to vector<128x128xf32>
      %159 = arith.select %157, %158, %144 : vector<128x128xi1>, vector<128x128xf32>
      %c10_i32 = arith.constant 10 : i32
      %cst_67 = arith.constant 0.000000e+00 : f32
      %160 = vector.broadcast %cst_67 : f32 to vector<128x128xf32>
      %161 = arith.minimumf %159, %160 : vector<128x128xf32>
      %cst_68 = arith.constant dense<0.000000e+00> : vector<128xf32>
      %162 = vector.multi_reduction <add>, %161, %cst_68 [0] : vector<128x128xf32> to vector<128xf32>
      %163 = vector.shape_cast %162 : vector<128xf32> to vector<1x128xf32>
      %cst_69 = arith.constant 0.000000e+00 : f32
      %164 = vector.broadcast %cst_69 : f32 to vector<1x128xf32>
      %165 = arith.subf %164, %163 : vector<1x128xf32>
      %cst_70 = arith.constant dense<0xFF800000> : vector<128xf32>
      %166 = vector.multi_reduction <maximumf>, %159, %cst_70 [0] : vector<128x128xf32> to vector<128xf32>
      %167 = vector.shape_cast %166 : vector<128xf32> to vector<1x128xf32>
      %cst_71 = arith.constant 1.600000e+01 : f32
      %168 = vector.broadcast %cst_71 : f32 to vector<1x128xf32>
      %169 = arith.cmpf olt, %165, %168 : vector<1x128xf32>
      %170 = arith.select %169, %167, %155 : vector<1x128xi1>, vector<1x128xf32>
      %171 = vector.broadcast %167 : vector<1x128xf32> to vector<128x128xf32>
      %172 = arith.cmpf oeq, %159, %171 : vector<128x128xf32>
      %cst_72 = arith.constant -1.000000e+00 : f32
      %173 = vector.broadcast %cst_72 : f32 to vector<128x128xf32>
      %174 = arith.select %172, %173, %159 : vector<128x128xi1>, vector<128x128xf32>
      %c11_i32 = arith.constant 11 : i32
      %cst_73 = arith.constant 0.000000e+00 : f32
      %175 = vector.broadcast %cst_73 : f32 to vector<128x128xf32>
      %176 = arith.minimumf %174, %175 : vector<128x128xf32>
      %cst_74 = arith.constant dense<0.000000e+00> : vector<128xf32>
      %177 = vector.multi_reduction <add>, %176, %cst_74 [0] : vector<128x128xf32> to vector<128xf32>
      %178 = vector.shape_cast %177 : vector<128xf32> to vector<1x128xf32>
      %cst_75 = arith.constant 0.000000e+00 : f32
      %179 = vector.broadcast %cst_75 : f32 to vector<1x128xf32>
      %180 = arith.subf %179, %178 : vector<1x128xf32>
      %cst_76 = arith.constant dense<0xFF800000> : vector<128xf32>
      %181 = vector.multi_reduction <maximumf>, %174, %cst_76 [0] : vector<128x128xf32> to vector<128xf32>
      %182 = vector.shape_cast %181 : vector<128xf32> to vector<1x128xf32>
      %cst_77 = arith.constant 1.600000e+01 : f32
      %183 = vector.broadcast %cst_77 : f32 to vector<1x128xf32>
      %184 = arith.cmpf olt, %180, %183 : vector<1x128xf32>
      %185 = arith.select %184, %182, %170 : vector<1x128xi1>, vector<1x128xf32>
      %186 = vector.broadcast %182 : vector<1x128xf32> to vector<128x128xf32>
      %187 = arith.cmpf oeq, %174, %186 : vector<128x128xf32>
      %cst_78 = arith.constant -1.000000e+00 : f32
      %188 = vector.broadcast %cst_78 : f32 to vector<128x128xf32>
      %189 = arith.select %187, %188, %174 : vector<128x128xi1>, vector<128x128xf32>
      %c12_i32 = arith.constant 12 : i32
      %cst_79 = arith.constant 0.000000e+00 : f32
      %190 = vector.broadcast %cst_79 : f32 to vector<128x128xf32>
      %191 = arith.minimumf %189, %190 : vector<128x128xf32>
      %cst_80 = arith.constant dense<0.000000e+00> : vector<128xf32>
      %192 = vector.multi_reduction <add>, %191, %cst_80 [0] : vector<128x128xf32> to vector<128xf32>
      %193 = vector.shape_cast %192 : vector<128xf32> to vector<1x128xf32>
      %cst_81 = arith.constant 0.000000e+00 : f32
      %194 = vector.broadcast %cst_81 : f32 to vector<1x128xf32>
      %195 = arith.subf %194, %193 : vector<1x128xf32>
      %cst_82 = arith.constant dense<0xFF800000> : vector<128xf32>
      %196 = vector.multi_reduction <maximumf>, %189, %cst_82 [0] : vector<128x128xf32> to vector<128xf32>
      %197 = vector.shape_cast %196 : vector<128xf32> to vector<1x128xf32>
      %cst_83 = arith.constant 1.600000e+01 : f32
      %198 = vector.broadcast %cst_83 : f32 to vector<1x128xf32>
      %199 = arith.cmpf olt, %195, %198 : vector<1x128xf32>
      %200 = arith.select %199, %197, %185 : vector<1x128xi1>, vector<1x128xf32>
      %201 = vector.broadcast %197 : vector<1x128xf32> to vector<128x128xf32>
      %202 = arith.cmpf oeq, %189, %201 : vector<128x128xf32>
      %cst_84 = arith.constant -1.000000e+00 : f32
      %203 = vector.broadcast %cst_84 : f32 to vector<128x128xf32>
      %204 = arith.select %202, %203, %189 : vector<128x128xi1>, vector<128x128xf32>
      %c13_i32 = arith.constant 13 : i32
      %cst_85 = arith.constant 0.000000e+00 : f32
      %205 = vector.broadcast %cst_85 : f32 to vector<128x128xf32>
      %206 = arith.minimumf %204, %205 : vector<128x128xf32>
      %cst_86 = arith.constant dense<0.000000e+00> : vector<128xf32>
      %207 = vector.multi_reduction <add>, %206, %cst_86 [0] : vector<128x128xf32> to vector<128xf32>
      %208 = vector.shape_cast %207 : vector<128xf32> to vector<1x128xf32>
      %cst_87 = arith.constant 0.000000e+00 : f32
      %209 = vector.broadcast %cst_87 : f32 to vector<1x128xf32>
      %210 = arith.subf %209, %208 : vector<1x128xf32>
      %cst_88 = arith.constant dense<0xFF800000> : vector<128xf32>
      %211 = vector.multi_reduction <maximumf>, %204, %cst_88 [0] : vector<128x128xf32> to vector<128xf32>
      %212 = vector.shape_cast %211 : vector<128xf32> to vector<1x128xf32>
      %cst_89 = arith.constant 1.600000e+01 : f32
      %213 = vector.broadcast %cst_89 : f32 to vector<1x128xf32>
      %214 = arith.cmpf olt, %210, %213 : vector<1x128xf32>
      %215 = arith.select %214, %212, %200 : vector<1x128xi1>, vector<1x128xf32>
      %216 = vector.broadcast %212 : vector<1x128xf32> to vector<128x128xf32>
      %217 = arith.cmpf oeq, %204, %216 : vector<128x128xf32>
      %cst_90 = arith.constant -1.000000e+00 : f32
      %218 = vector.broadcast %cst_90 : f32 to vector<128x128xf32>
      %219 = arith.select %217, %218, %204 : vector<128x128xi1>, vector<128x128xf32>
      %c14_i32 = arith.constant 14 : i32
      %cst_91 = arith.constant 0.000000e+00 : f32
      %220 = vector.broadcast %cst_91 : f32 to vector<128x128xf32>
      %221 = arith.minimumf %219, %220 : vector<128x128xf32>
      %cst_92 = arith.constant dense<0.000000e+00> : vector<128xf32>
      %222 = vector.multi_reduction <add>, %221, %cst_92 [0] : vector<128x128xf32> to vector<128xf32>
      %223 = vector.shape_cast %222 : vector<128xf32> to vector<1x128xf32>
      %cst_93 = arith.constant 0.000000e+00 : f32
      %224 = vector.broadcast %cst_93 : f32 to vector<1x128xf32>
      %225 = arith.subf %224, %223 : vector<1x128xf32>
      %cst_94 = arith.constant dense<0xFF800000> : vector<128xf32>
      %226 = vector.multi_reduction <maximumf>, %219, %cst_94 [0] : vector<128x128xf32> to vector<128xf32>
      %227 = vector.shape_cast %226 : vector<128xf32> to vector<1x128xf32>
      %cst_95 = arith.constant 1.600000e+01 : f32
      %228 = vector.broadcast %cst_95 : f32 to vector<1x128xf32>
      %229 = arith.cmpf olt, %225, %228 : vector<1x128xf32>
      %230 = arith.select %229, %227, %215 : vector<1x128xi1>, vector<1x128xf32>
      %231 = vector.broadcast %227 : vector<1x128xf32> to vector<128x128xf32>
      %232 = arith.cmpf oeq, %219, %231 : vector<128x128xf32>
      %cst_96 = arith.constant -1.000000e+00 : f32
      %233 = vector.broadcast %cst_96 : f32 to vector<128x128xf32>
      %234 = arith.select %232, %233, %219 : vector<128x128xi1>, vector<128x128xf32>
      %c15_i32 = arith.constant 15 : i32
      %cst_97 = arith.constant 0.000000e+00 : f32
      %235 = vector.broadcast %cst_97 : f32 to vector<128x128xf32>
      %236 = arith.minimumf %234, %235 : vector<128x128xf32>
      %cst_98 = arith.constant dense<0.000000e+00> : vector<128xf32>
      %237 = vector.multi_reduction <add>, %236, %cst_98 [0] : vector<128x128xf32> to vector<128xf32>
      %238 = vector.shape_cast %237 : vector<128xf32> to vector<1x128xf32>
      %cst_99 = arith.constant 0.000000e+00 : f32
      %239 = vector.broadcast %cst_99 : f32 to vector<1x128xf32>
      %240 = arith.subf %239, %238 : vector<1x128xf32>
      %cst_100 = arith.constant dense<0xFF800000> : vector<128xf32>
      %241 = vector.multi_reduction <maximumf>, %234, %cst_100 [0] : vector<128x128xf32> to vector<128xf32>
      %242 = vector.shape_cast %241 : vector<128xf32> to vector<1x128xf32>
      %cst_101 = arith.constant 1.600000e+01 : f32
      %243 = vector.broadcast %cst_101 : f32 to vector<1x128xf32>
      %244 = arith.cmpf olt, %240, %243 : vector<1x128xf32>
      %245 = arith.select %244, %242, %230 : vector<1x128xi1>, vector<1x128xf32>
      %246 = vector.broadcast %242 : vector<1x128xf32> to vector<128x128xf32>
      %247 = arith.cmpf oeq, %234, %246 : vector<128x128xf32>
      %cst_102 = arith.constant -1.000000e+00 : f32
      %248 = vector.broadcast %cst_102 : f32 to vector<128x128xf32>
      %249 = arith.select %247, %248, %234 : vector<128x128xi1>, vector<128x128xf32>
      %250 = vector.broadcast %245 : vector<1x128xf32> to vector<128x128xf32>
      %251 = arith.subf %8, %250 : vector<128x128xf32>
      %cst_103 = arith.constant 0.000000e+00 : f32
      %252 = vector.broadcast %cst_103 : f32 to vector<128x128xf32>
      %253 = arith.maximumf %251, %252 : vector<128x128xf32>
      %c0_104 = arith.constant 0 : index
      %254 = arith.index_cast %4 : i32 to index
      %255 = vector.load %arg2[%c0_104, %254] : memref<128x256xf32, #tpu.memory_space<vmem>>, vector<128x128xf32>
      tpu.vector_store %arg2[%c0_104, %254], %253 {strides = array<i32>} : memref<128x256xf32, #tpu.memory_space<vmem>>, vector<128x128xf32>,
    }
    %c2_i32_0 = arith.constant 2 : i32
    return
  }
  func.func @transform_0(%arg0: i32) -> (i32, i32) {
    %c0_i32 = arith.constant 0 : i32
    %c0_i32_0 = arith.constant 0 : i32
    return %c0_i32, %arg0 : i32, i32
  }
  func.func @transform_1(%arg0: i32) -> (i32, i32) {
    %c0_i32 = arith.constant 0 : i32
    %c0_i32_0 = arith.constant 0 : i32
    return %c0_i32, %arg0 : i32, i32
  }
}

</mosaic_0001>

<llo_original>
// kernel: tpu_custom_call.1
$region0: #{tpu_custom_call.1}
  #allocation0 [shape = 'u32[]', space=smem, size = 0x4, offset = 0x4, fixed_abs, tag = 'smem constant byte address 0x4 - core index']
  #allocation1 [shape = 'u32[144,128]{1,0:T(1,128)}', space=vmem, size = 0x12000, scoped, tag = 'internal scratch']
  %s0 = inlined_call_operand.hbm [shape: f32[128,1024], index: 0, kind: input, shape index: {}]
  %s1 = inlined_call_operand.hbm [shape: f32[128,1024], index: 1, kind: output, shape index: {}]
  %s2 = sld [smem:[#allocation0]]
  $region48: #{tpu_custom_call.1} parent=0
    _
  %s4 = ssub.s32 1, %s2
  %s5 = scalar_select 0, %s4, %s2
  $region1: #{tpu_custom_call.1} parent=0
    #allocation2 [shape = 'u8[262144]{0}', space=vmem, size = 0x40000, scoped, tag = 'input window, operand 0']
    #allocation3 [shape = 's32[2]{0}', space=sflag, size = 0x8, scoped, tag = 'scoped memory for tpu_custom_call.1']
    #allocation4 [shape = 's32[2]{0}', space=sflag, size = 0x8, scoped, tag = 'scoped memory for tpu_custom_call.1']
    #allocation5 [shape = 'u8[262144]{0}', space=vmem, size = 0x40000, scoped, tag = 'output window, operand 0']
    %6 = vsyncpa [#allocation3], 0
    %s7 = scalar_lea.sflag [#allocation3], 1
    %8 = vsyncpa %s7, 0
    %9 = vsyncpa [#allocation4], 0
    %s10 = scalar_lea.sflag [#allocation4], 1
    %11 = vsyncpa %s10, 0
    loop: start=0, step=1, limit=6
    $region2: #{tpu_custom_call.1} parent=1 // loop_pre_header
      _
    $region3: #{tpu_custom_call.1} parent=1 // loop_header
      %s13 = sphi 0, %s17
      %p14 = scmp.ge.s32.totalorder %s13, 6
      %s23 = sphi 0, %s25
      %s26 = sphi 0, %s23
      %s27 = sphi 0, %s26
      %s43 = sphi 0, %s27
      %s49 = sphi 0, %s51
      %s52 = sphi 0, %s49
      %s53 = sphi 0, %s52
      %s69 = sphi 0, %s53
    $region4: #{tpu_custom_call.1} parent=1 // loop_header_branch
      %16 = sbr.rel (%p14) target = $region8
    $region5: #{tpu_custom_call.1} parent=1 // loop_body
      %s18 = ssub.s32 %s13, 1
      %s19 = ssub.s32 %s13, 2
      %s20 = sadd.s32 %s13, 1
      %s21 = ssub.s32 %s13, %s20
      %p22 = scmp.eq.s32.totalorder %s21, 0
      %s24 = sadd.s32 %s23, 1
      %s25 = scalar_select %p22, %s23, %s24
      %p28 = pneg %p22
      %p29 = scmp.eq.s32.totalorder %s13, 3
      %p30 = por %p28, %p29
      %p31 = scmp.ne.s32.totalorder %s23, %s26
      %p32 = scmp.eq.s32.totalorder %s13, 0
      %p33 = por %p31, %p32
      %p34 = scmp.ne.s32.totalorder %s23, %s26
      %p35 = scmp.eq.s32.totalorder %s18, 3
      %p36 = por %p34, %p35
      %p37 = scmp.ne.s32.totalorder %s26, %s27
      %p38 = scmp.eq.s32.totalorder %s18, 0
      %p39 = por %p37, %p38
      %p40 = scmp.ne.s32.totalorder %s26, %s27
      %p41 = scmp.eq.s32.totalorder %s19, 3
      %p42 = por %p40, %p41
      %p44 = scmp.ne.s32.totalorder %s27, %s43
      %p45 = scmp.eq.s32.totalorder %s19, 0
      %p46 = por %p44, %p45
      %s47 = ssub.s32 %s13, %s20
      %p48 = scmp.eq.s32.totalorder %s47, 0
      %s50 = sadd.s32 %s49, 1
      %s51 = scalar_select %p48, %s49, %s50
      %p54 = pneg %p48
      %p55 = scmp.eq.s32.totalorder %s13, 3
      %p56 = por %p54, %p55
      %p57 = scmp.ne.s32.totalorder %s49, %s52
      %p58 = scmp.eq.s32.totalorder %s13, 0
      %p59 = por %p57, %p58
      %p60 = scmp.ne.s32.totalorder %s49, %s52
      %p61 = scmp.eq.s32.totalorder %s18, 3
      %p62 = por %p60, %p61
      %p63 = scmp.ne.s32.totalorder %s52, %s53
      %p64 = scmp.eq.s32.totalorder %s18, 0
      %p65 = por %p63, %p64
      %p66 = scmp.ne.s32.totalorder %s52, %s53
      %p67 = scmp.eq.s32.totalorder %s19, 3
      %p68 = por %p66, %p67
      %p70 = scmp.ne.s32.totalorder %s53, %s69
      %p71 = scmp.eq.s32.totalorder %s19, 0
      %p72 = por %p70, %p71
      %p73 = scmp.le.s32.totalorder 1, %s13
      %p74 = scmp.lt.s32.totalorder %s13, 5
      %p75 = pnand %p73, %p74
      %p76 = pneg %p75
      // Predicated region
      $region9: #{tpu_custom_call.1} parent=5 // pred_check
        _
      $region10: #{tpu_custom_call.1} parent=5 // pred_check_branch
        %78 = sbr.rel (%p75) target = $region12
      $region11: #{tpu_custom_call.1} parent=5 // pred_region
        %s79 = ssub.s32 %s13, 1
      $region12: #{tpu_custom_call.1} parent=5 // pred_fallthru
        _
      %p80 = scmp.lt.s32.totalorder %s13, 4
      // Predicated region
      $region13: #{tpu_custom_call.1} parent=5 // pred_check
        %p81 = pneg %p80
      $region14: #{tpu_custom_call.1} parent=5 // pred_check_branch
        %83 = sbr.rel (%p81) target = $region16
      $region15: #{tpu_custom_call.1} parent=5 // pred_region
        // Predicated region
        $region17: #{tpu_custom_call.1} parent=15 // pred_check
          %p84 = pneg %p33
        $region18: #{tpu_custom_call.1} parent=15 // pred_check_branch
          %86 = sbr.rel (%p84) target = $region20
        $region19: #{tpu_custom_call.1} parent=15 // pred_region
          %s87 = sand.u32 %s23, 1
          %s88 = scalar_lea.sflag [#allocation3], %s87
          %s89 = sand.u32 %s23, 1
          %s90 = smul.addr %s89, 256
          %s91 = scalar_lea.vmem [#allocation2], %s90
          %s92 = smul.u32 2, %s13
          %s94 = ssub.s32 4096, 4096
          %95 = vsyncadd %s88, %s94
          %s96 = smul.addr %s92, 128
          %s97 = scalar_lea.hbm %s0, %s96
          %s98 = sshll.u32 %s91, 4
          %s99 = int_to_ptr.vmem [resolvable:$true] %s98
          %104 = dma.hbm_to_vmem [thread:$0]  %s97, 4096, %s99, %s88, 1024, 256, 16
        $region20: #{tpu_custom_call.1} parent=15 // pred_fallthru
          _
      $region16: #{tpu_custom_call.1} parent=5 // pred_fallthru
        _
      %p105 = scmp.le.s32.totalorder 1, %s13
      %p106 = scmp.lt.s32.totalorder %s13, 5
      %p107 = pnand %p105, %p106
      %p108 = pneg %p107
      // Predicated region
      $region21: #{tpu_custom_call.1} parent=5 // pred_check
        _
      $region22: #{tpu_custom_call.1} parent=5 // pred_check_branch
        %110 = sbr.rel (%p107) target = $region24
      $region23: #{tpu_custom_call.1} parent=5 // pred_region
        %s111 = ssub.s32 %s13, 1
        %s112 = sand.u32 %s26, 1
        %s113 = scalar_lea.sflag [#allocation3], %s112
        %s114 = sand.u32 %s26, 1
        %s115 = smul.addr %s114, 256
        %s116 = scalar_lea.vmem [#allocation2], %s115
        // Predicated region
        $region25: #{tpu_custom_call.1} parent=23 // pred_check
          %p117 = pneg %p39
        $region26: #{tpu_custom_call.1} parent=23 // pred_check_branch
          %119 = sbr.rel (%p117) target = $region28
        $region27: #{tpu_custom_call.1} parent=23 // pred_region
          %120 = dma.done %s113, 4096
        $region28: #{tpu_custom_call.1} parent=23 // pred_fallthru
          _
        %s121 = sand.u32 %s26, 1
        %s122 = scalar_lea.sflag [#allocation3], %s121
        %s123 = sand.u32 %s26, 1
        %s124 = smul.addr %s123, 256
        %s125 = scalar_lea.vmem [#allocation2], %s124
        %p126 = pneg %p39
        %p127 = pneg %p36
        %p128 = pneg %p65
        %p129 = pneg %p62
        %s130 = sand.u32 %s52, 1
        %s131 = scalar_lea.sflag [#allocation4], %s130
        %s132 = sand.u32 %s52, 1
        %s133 = smul.addr %s132, 256
        %s134 = scalar_lea.vmem [#allocation5], %s133
        %s135 = smul.u32 2, %s18
        %s136 = smul.u32 2, %s18
        loop: start=0, step=1, limit=2
        $region29: #{tpu_custom_call.1} parent=23 // loop_pre_header
          _
        $region30: #{tpu_custom_call.1} parent=23 // loop_header
          %s138 = sphi 0, %s142
          %p139 = scmp.ge.s32.totalorder %s138, 2
        $region31: #{tpu_custom_call.1} parent=23 // loop_header_branch
          %141 = sbr.rel (%p139) target = $region35
        $region32: #{tpu_custom_call.1} parent=23 // loop_body
          %s143 = smul.u32 %s138, 128
          %s144 = sshra.s32 %s143, 7
          %s145 = sand.u32 %s143, 127
          %s146 = smul.addr %s144, 8
          %s147 = scalar_lea.vmem %s116, %s146 [#allocation2]
          %v148 = vld [vmem:[%s147] sm:$0xff]
          %v149 = vld [vmem:[%s147 + $0x10] sm:$0xff]
          %v150 = vld [vmem:[%s147 + $0x20] sm:$0xff]
          %v151 = vld [vmem:[%s147 + $0x30] sm:$0xff]
          %v152 = vld [vmem:[%s147 + $0x40] sm:$0xff]
          %v153 = vld [vmem:[%s147 + $0x50] sm:$0xff]
          %v154 = vld [vmem:[%s147 + $0x60] sm:$0xff]
          %v155 = vld [vmem:[%s147 + $0x70] sm:$0xff]
          %v156 = vld [vmem:[%s147 + $0x80] sm:$0xff]
          %v157 = vld [vmem:[%s147 + $0x90] sm:$0xff]
          %v158 = vld [vmem:[%s147 + $0xa0] sm:$0xff]
          %v159 = vld [vmem:[%s147 + $0xb0] sm:$0xff]
          %v160 = vld [vmem:[%s147 + $0xc0] sm:$0xff]
          %v161 = vld [vmem:[%s147 + $0xd0] sm:$0xff]
          %v162 = vld [vmem:[%s147 + $0xe0] sm:$0xff]
          %v163 = vld [vmem:[%s147 + $0xf0] sm:$0xff]
          %v164 = vmax.f32 %v148, 0.0
          %v165 = vmax.f32 %v149, 0.0
          %v166 = vmax.f32 %v150, 0.0
          %v167 = vmax.f32 %v151, 0.0
          %v168 = vmax.f32 %v152, 0.0
          %v169 = vmax.f32 %v153, 0.0
          %v170 = vmax.f32 %v154, 0.0
          %v171 = vmax.f32 %v155, 0.0
          %v172 = vmax.f32 %v156, 0.0
          %v173 = vmax.f32 %v157, 0.0
          %v174 = vmax.f32 %v158, 0.0
          %v175 = vmax.f32 %v159, 0.0
          %v176 = vmax.f32 %v160, 0.0
          %v177 = vmax.f32 %v161, 0.0
          %v178 = vmax.f32 %v162, 0.0
          %v179 = vmax.f32 %v163, 0.0
          %v180 = vmin.f32 %v164, 0.0
          %v181 = vmin.f32 %v165, 0.0
          %v182 = vmin.f32 %v166, 0.0
          %v183 = vmin.f32 %v167, 0.0
          %v184 = vmin.f32 %v168, 0.0
          %v185 = vmin.f32 %v169, 0.0
          %v186 = vmin.f32 %v170, 0.0
          %v187 = vmin.f32 %v171, 0.0
          %v188 = vmin.f32 %v172, 0.0
          %v189 = vmin.f32 %v173, 0.0
          %v190 = vmin.f32 %v174, 0.0
          %v191 = vmin.f32 %v175, 0.0
          %v192 = vmin.f32 %v176, 0.0
          %v193 = vmin.f32 %v177, 0.0
          %v194 = vmin.f32 %v178, 0.0
          %v195 = vmin.f32 %v179, 0.0
          %v196 = vadd.f32 %v180, %v181
          %v197 = vadd.f32 %v196, %v182
          %v198 = vadd.f32 %v197, %v183
          %v199 = vadd.f32 %v198, %v184
          %v200 = vadd.f32 %v199, %v185
          %v201 = vadd.f32 %v200, %v186
          %v202 = vadd.f32 %v201, %v187
          %v203 = vadd.f32 %v202, %v188
          %v204 = vadd.f32 %v203, %v189
          %v205 = vadd.f32 %v204, %v190
          %v206 = vadd.f32 %v205, %v191
          %v207 = vadd.f32 %v206, %v192
          %v208 = vadd.f32 %v207, %v193
          %v209 = vadd.f32 %v208, %v194
          %v210 = vadd.f32 %v209, %v195
          %v211 = vrot.slane %v210, 4
          %v212 = vadd.f32 %v210, %v211
          %v213 = vrot.slane %v212, 2
          %v214 = vadd.f32 %v212, %v213
          %v215 = vrot.slane %v214, 1
          %v216 = vadd.f32 %v214, %v215
          %v217 = vsub.f32 0.0, %v216
          %v218 = vmax.f32 %v164, %v168
          %v219 = vmax.f32 %v165, %v169
          %v220 = vmax.f32 %v166, %v170
          %v221 = vmax.f32 %v167, %v171
          %v222 = vmax.f32 %v218, %v172
          %v223 = vmax.f32 %v219, %v173
          %v224 = vmax.f32 %v220, %v174
          %v225 = vmax.f32 %v221, %v175
          %v226 = vmax.f32 %v222, %v176
          %v227 = vmax.f32 %v223, %v177
          %v228 = vmax.f32 %v224, %v178
          %v229 = vmax.f32 %v225, %v179
          %v230 = vmax.f32 %v226, %v227
          %v231 = vmax.f32 %v228, %v229
          %v232 = vmax.f32 %v230, %v231
          %v233 = vrot.slane %v232, 4
          %v234 = vmax.f32 %v232, %v233
          %v235 = vrot.slane %v234, 2
          %v236 = vmax.f32 %v234, %v235
          %v237 = vrot.slane %v236, 1
          %v238 = vmax.f32 %v236, %v237
          %vm239 = vcmp.lt.f32.partialorder %v217, 16.0
          %v240 = vsel %vm239, %v238, 0.0
          %vm241 = vcmp.eq.f32.partialorder %v164, %v238
          %vm242 = vcmp.eq.f32.partialorder %v165, %v238
          %vm243 = vcmp.eq.f32.partialorder %v166, %v238
          %vm244 = vcmp.eq.f32.partialorder %v167, %v238
          %vm245 = vcmp.eq.f32.partialorder %v168, %v238
          %vm246 = vcmp.eq.f32.partialorder %v169, %v238
          %vm247 = vcmp.eq.f32.partialorder %v170, %v238
          %vm248 = vcmp.eq.f32.partialorder %v171, %v238
          %vm249 = vcmp.eq.f32.partialorder %v172, %v238
          %vm250 = vcmp.eq.f32.partialorder %v173, %v238
          %vm251 = vcmp.eq.f32.partialorder %v174, %v238
          %vm252 = vcmp.eq.f32.partialorder %v175, %v238
          %vm253 = vcmp.eq.f32.partialorder %v176, %v238
          %vm254 = vcmp.eq.f32.partialorder %v177, %v238
          %vm255 = vcmp.eq.f32.partialorder %v178, %v238
          %vm256 = vcmp.eq.f32.partialorder %v179, %v238
          %v257 = vsel %vm241, -1.0, %v164
          %v258 = vsel %vm242, -1.0, %v165
          %v259 = vsel %vm243, -1.0, %v166
          %v260 = vsel %vm244, -1.0, %v167
          %v261 = vsel %vm245, -1.0, %v168
          %v262 = vsel %vm246, -1.0, %v169
          %v263 = vsel %vm247, -1.0, %v170
          %v264 = vsel %vm248, -1.0, %v171
          %v265 = vsel %vm249, -1.0, %v172
          %v266 = vsel %vm250, -1.0, %v173
          %v267 = vsel %vm251, -1.0, %v174
          %v268 = vsel %vm252, -1.0, %v175
          %v269 = vsel %vm253, -1.0, %v176
          %v270 = vsel %vm254, -1.0, %v177
          %v271 = vsel %vm255, -1.0, %v178
          %v272 = vsel %vm256, -1.0, %v179
          %v273 = vmin.f32 %v257, 0.0
          %v274 = vmin.f32 %v258, 0.0
          %v275 = vmin.f32 %v259, 0.0
          %v276 = vmin.f32 %v260, 0.0
          %v277 = vmin.f32 %v261, 0.0
          %v278 = vmin.f32 %v262, 0.0
          %v279 = vmin.f32 %v263, 0.0
          %v280 = vmin.f32 %v264, 0.0
          %v281 = vmin.f32 %v265, 0.0
          %v282 = vmin.f32 %v266, 0.0
          %v283 = vmin.f32 %v267, 0.0
          %v284 = vmin.f32 %v268, 0.0
          %v285 = vmin.f32 %v269, 0.0
          %v286 = vmin.f32 %v270, 0.0
          %v287 = vmin.f32 %v271, 0.0
          %v288 = vmin.f32 %v272, 0.0
          %v289 = vadd.f32 %v273, %v274
          %v290 = vadd.f32 %v289, %v275
          %v291 = vadd.f32 %v290, %v276
          %v292 = vadd.f32 %v291, %v277
          %v293 = vadd.f32 %v292, %v278
          %v294 = vadd.f32 %v293, %v279
          %v295 = vadd.f32 %v294, %v280
          %v296 = vadd.f32 %v295, %v281
          %v297 = vadd.f32 %v296, %v282
          %v298 = vadd.f32 %v297, %v283
          %v299 = vadd.f32 %v298, %v284
          %v300 = vadd.f32 %v299, %v285
          %v301 = vadd.f32 %v300, %v286
          %v302 = vadd.f32 %v301, %v287
          %v303 = vadd.f32 %v302, %v288
          %v304 = vrot.slane %v303, 4
          %v305 = vadd.f32 %v303, %v304
          %v306 = vrot.slane %v305, 2
          %v307 = vadd.f32 %v305, %v306
          %v308 = vrot.slane %v307, 1
          %v309 = vadd.f32 %v307, %v308
          %v310 = vsub.f32 0.0, %v309
          %v311 = vmax.f32 %v257, %v261
          %v312 = vmax.f32 %v258, %v262
          %v313 = vmax.f32 %v259, %v263
          %v314 = vmax.f32 %v260, %v264
          %v315 = vmax.f32 %v311, %v265
          %v316 = vmax.f32 %v312, %v266
          %v317 = vmax.f32 %v313, %v267
          %v318 = vmax.f32 %v314, %v268
          %v319 = vmax.f32 %v315, %v269
          %v320 = vmax.f32 %v316, %v270
          %v321 = vmax.f32 %v317, %v271
          %v322 = vmax.f32 %v318, %v272
          %v323 = vmax.f32 %v319, %v320
          %v324 = vmax.f32 %v321, %v322
          %v325 = vmax.f32 %v323, %v324
          %v326 = vrot.slane %v325, 4
          %v327 = vmax.f32 %v325, %v326
          %v328 = vrot.slane %v327, 2
          %v329 = vmax.f32 %v327, %v328
          %v330 = vrot.slane %v329, 1
          %v331 = vmax.f32 %v329, %v330
          %vm332 = vcmp.lt.f32.partialorder %v310, 16.0
          %v333 = vsel %vm332, %v331, %v240
          %vm334 = vcmp.eq.f32.partialorder %v257, %v331
          %vm335 = vcmp.eq.f32.partialorder %v258, %v331
          %vm336 = vcmp.eq.f32.partialorder %v259, %v331
          %vm337 = vcmp.eq.f32.partialorder %v260, %v331
          %vm338 = vcmp.eq.f32.partialorder %v261, %v331
          %vm339 = vcmp.eq.f32.partialorder %v262, %v331
          %vm340 = vcmp.eq.f32.partialorder %v263, %v331
          %vm341 = vcmp.eq.f32.partialorder %v264, %v331
          %vm342 = vcmp.eq.f32.partialorder %v265, %v331
          %vm343 = vcmp.eq.f32.partialorder %v266, %v331
          %vm344 = vcmp.eq.f32.partialorder %v267, %v331
          %vm345 = vcmp.eq.f32.partialorder %v268, %v331
          %vm346 = vcmp.eq.f32.partialorder %v269, %v331
          %vm347 = vcmp.eq.f32.partialorder %v270, %v331
          %vm348 = vcmp.eq.f32.partialorder %v271, %v331
          %vm349 = vcmp.eq.f32.partialorder %v272, %v331
          %v350 = vsel %vm334, -1.0, %v257
          %v351 = vsel %vm335, -1.0, %v258
          %v352 = vsel %vm336, -1.0, %v259
          %v353 = vsel %vm337, -1.0, %v260
          %v354 = vsel %vm338, -1.0, %v261
          %v355 = vsel %vm339, -1.0, %v262
          %v356 = vsel %vm340, -1.0, %v263
          %v357 = vsel %vm341, -1.0, %v264
          %v358 = vsel %vm342, -1.0, %v265
          %v359 = vsel %vm343, -1.0, %v266
          %v360 = vsel %vm344, -1.0, %v267
          %v361 = vsel %vm345, -1.0, %v268
          %v362 = vsel %vm346, -1.0, %v269
          %v363 = vsel %vm347, -1.0, %v270
          %v364 = vsel %vm348, -1.0, %v271
          %v365 = vsel %vm349, -1.0, %v272
          %v366 = vmin.f32 %v350, 0.0
          %v367 = vmin.f32 %v351, 0.0
          %v368 = vmin.f32 %v352, 0.0
          %v369 = vmin.f32 %v353, 0.0
          %v370 = vmin.f32 %v354, 0.0
          %v371 = vmin.f32 %v355, 0.0
          %v372 = vmin.f32 %v356, 0.0
          %v373 = vmin.f32 %v357, 0.0
          %v374 = vmin.f32 %v358, 0.0
          %v375 = vmin.f32 %v359, 0.0
          %v376 = vmin.f32 %v360, 0.0
          %v377 = vmin.f32 %v361, 0.0
          %v378 = vmin.f32 %v362, 0.0
          %v379 = vmin.f32 %v363, 0.0
          %v380 = vmin.f32 %v364, 0.0
          %v381 = vmin.f32 %v365, 0.0
          %v382 = vadd.f32 %v366, %v367
          %v383 = vadd.f32 %v382, %v368
          %v384 = vadd.f32 %v383, %v369
          %v385 = vadd.f32 %v384, %v370
          %v386 = vadd.f32 %v385, %v371
          %v387 = vadd.f32 %v386, %v372
          %v388 = vadd.f32 %v387, %v373
          %v389 = vadd.f32 %v388, %v374
          %v390 = vadd.f32 %v389, %v375
          %v391 = vadd.f32 %v390, %v376
          %v392 = vadd.f32 %v391, %v377
          %v393 = vadd.f32 %v392, %v378
          %v394 = vadd.f32 %v393, %v379
          %v395 = vadd.f32 %v394, %v380
          %v396 = vadd.f32 %v395, %v381
          %v397 = vrot.slane %v396, 4
          %v398 = vadd.f32 %v396, %v397
          %v399 = vrot.slane %v398, 2
          %v400 = vadd.f32 %v398, %v399
          %v401 = vrot.slane %v400, 1
          %v402 = vadd.f32 %v400, %v401
          %v403 = vsub.f32 0.0, %v402
          %v404 = vmax.f32 %v350, %v354
          %v405 = vmax.f32 %v351, %v355
          %v406 = vmax.f32 %v352, %v356
          %v407 = vmax.f32 %v353, %v357
          %v408 = vmax.f32 %v404, %v358
          %v409 = vmax.f32 %v405, %v359
          %v410 = vmax.f32 %v406, %v360
          %v411 = vmax.f32 %v407, %v361
          %v412 = vmax.f32 %v408, %v362
          %v413 = vmax.f32 %v409, %v363
          %v414 = vmax.f32 %v410, %v364
          %v415 = vmax.f32 %v411, %v365
          %v416 = vmax.f32 %v412, %v413
          %v417 = vmax.f32 %v414, %v415
          %v418 = vmax.f32 %v416, %v417
          %v419 = vrot.slane %v418, 4
          %v420 = vmax.f32 %v418, %v419
          %v421 = vrot.slane %v420, 2
          %v422 = vmax.f32 %v420, %v421
          %v423 = vrot.slane %v422, 1
          %v424 = vmax.f32 %v422, %v423
          %vm425 = vcmp.lt.f32.partialorder %v403, 16.0
          %v426 = vsel %vm425, %v424, %v333
          %vm427 = vcmp.eq.f32.partialorder %v350, %v424
          %vm428 = vcmp.eq.f32.partialorder %v351, %v424
          %vm429 = vcmp.eq.f32.partialorder %v352, %v424
          %vm430 = vcmp.eq.f32.partialorder %v353, %v424
          %vm431 = vcmp.eq.f32.partialorder %v354, %v424
          %vm432 = vcmp.eq.f32.partialorder %v355, %v424
          %vm433 = vcmp.eq.f32.partialorder %v356, %v424
          %vm434 = vcmp.eq.f32.partialorder %v357, %v424
          %vm435 = vcmp.eq.f32.partialorder %v358, %v424
          %vm436 = vcmp.eq.f32.partialorder %v359, %v424
          %vm437 = vcmp.eq.f32.partialorder %v360, %v424
          %vm438 = vcmp.eq.f32.partialorder %v361, %v424
          %vm439 = vcmp.eq.f32.partialorder %v362, %v424
          %vm440 = vcmp.eq.f32.partialorder %v363, %v424
          %vm441 = vcmp.eq.f32.partialorder %v364, %v424
          %vm442 = vcmp.eq.f32.partialorder %v365, %v424
          %v443 = vsel %vm427, -1.0, %v350
          %v444 = vsel %vm428, -1.0, %v351
          %v445 = vsel %vm429, -1.0, %v352
          %v446 = vsel %vm430, -1.0, %v353
          %v447 = vsel %vm431, -1.0, %v354
          %v448 = vsel %vm432, -1.0, %v355
          %v449 = vsel %vm433, -1.0, %v356
          %v450 = vsel %vm434, -1.0, %v357
          %v451 = vsel %vm435, -1.0, %v358
          %v452 = vsel %vm436, -1.0, %v359
          %v453 = vsel %vm437, -1.0, %v360
          %v454 = vsel %vm438, -1.0, %v361
          %v455 = vsel %vm439, -1.0, %v362
          %v456 = vsel %vm440, -1.0, %v363
          %v457 = vsel %vm441, -1.0, %v364
          %v458 = vsel %vm442, -1.0, %v365
          %v459 = vmin.f32 %v443, 0.0
          %v460 = vmin.f32 %v444, 0.0
          %v461 = vmin.f32 %v445, 0.0
          %v462 = vmin.f32 %v446, 0.0
          %v463 = vmin.f32 %v447, 0.0
          %v464 = vmin.f32 %v448, 0.0
          %v465 = vmin.f32 %v449, 0.0
          %v466 = vmin.f32 %v450, 0.0
          %v467 = vmin.f32 %v451, 0.0
          %v468 = vmin.f32 %v452, 0.0
          %v469 = vmin.f32 %v453, 0.0
          %v470 = vmin.f32 %v454, 0.0
          %v471 = vmin.f32 %v455, 0.0
          %v472 = vmin.f32 %v456, 0.0
          %v473 = vmin.f32 %v457, 0.0
          %v474 = vmin.f32 %v458, 0.0
          %v475 = vadd.f32 %v459, %v460
          %v476 = vadd.f32 %v475, %v461
          %v477 = vadd.f32 %v476, %v462
          %v478 = vadd.f32 %v477, %v463
          %v479 = vadd.f32 %v478, %v464
          %v480 = vadd.f32 %v479, %v465
          %v481 = vadd.f32 %v480, %v466
          %v482 = vadd.f32 %v481, %v467
          %v483 = vadd.f32 %v482, %v468
          %v484 = vadd.f32 %v483, %v469
          %v485 = vadd.f32 %v484, %v470
          %v486 = vadd.f32 %v485, %v471
          %v487 = vadd.f32 %v486, %v472
          %v488 = vadd.f32 %v487, %v473
          %v489 = vadd.f32 %v488, %v474
          %v490 = vrot.slane %v489, 4
          %v491 = vadd.f32 %v489, %v490
          %v492 = vrot.slane %v491, 2
          %v493 = vadd.f32 %v491, %v492
          %v494 = vrot.slane %v493, 1
          %v495 = vadd.f32 %v493, %v494
          %v496 = vsub.f32 0.0, %v495
          %v497 = vmax.f32 %v443, %v447
          %v498 = vmax.f32 %v444, %v448
          %v499 = vmax.f32 %v445, %v449
          %v500 = vmax.f32 %v446, %v450
          %v501 = vmax.f32 %v497, %v451
          %v502 = vmax.f32 %v498, %v452
          %v503 = vmax.f32 %v499, %v453
          %v504 = vmax.f32 %v500, %v454
          %v505 = vmax.f32 %v501, %v455
          %v506 = vmax.f32 %v502, %v456
          %v507 = vmax.f32 %v503, %v457
          %v508 = vmax.f32 %v504, %v458
          %v509 = vmax.f32 %v505, %v506
          %v510 = vmax.f32 %v507, %v508
          %v511 = vmax.f32 %v509, %v510
          %v512 = vrot.slane %v511, 4
          %v513 = vmax.f32 %v511, %v512
          %v514 = vrot.slane %v513, 2
          %v515 = vmax.f32 %v513, %v514
          %v516 = vrot.slane %v515, 1
          %v517 = vmax.f32 %v515, %v516
          %vm518 = vcmp.lt.f32.partialorder %v496, 16.0
          %v519 = vsel %vm518, %v517, %v426
          %vm520 = vcmp.eq.f32.partialorder %v443, %v517
          %vm521 = vcmp.eq.f32.partialorder %v444, %v517
          %vm522 = vcmp.eq.f32.partialorder %v445, %v517
          %vm523 = vcmp.eq.f32.partialorder %v446, %v517
          %vm524 = vcmp.eq.f32.partialorder %v447, %v517
          %vm525 = vcmp.eq.f32.partialorder %v448, %v517
          %vm526 = vcmp.eq.f32.partialorder %v449, %v517
          %vm527 = vcmp.eq.f32.partialorder %v450, %v517
          %vm528 = vcmp.eq.f32.partialorder %v451, %v517
          %vm529 = vcmp.eq.f32.partialorder %v452, %v517
          %vm530 = vcmp.eq.f32.partialorder %v453, %v517
          %vm531 = vcmp.eq.f32.partialorder %v454, %v517
          %vm532 = vcmp.eq.f32.partialorder %v455, %v517
          %vm533 = vcmp.eq.f32.partialorder %v456, %v517
          %vm534 = vcmp.eq.f32.partialorder %v457, %v517
          %vm535 = vcmp.eq.f32.partialorder %v458, %v517
          %v536 = vsel %vm520, -1.0, %v443
          %v537 = vsel %vm521, -1.0, %v444
          %v538 = vsel %vm522, -1.0, %v445
          %v539 = vsel %vm523, -1.0, %v446
          %v540 = vsel %vm524, -1.0, %v447
          %v541 = vsel %vm525, -1.0, %v448
          %v542 = vsel %vm526, -1.0, %v449
          %v543 = vsel %vm527, -1.0, %v450
          %v544 = vsel %vm528, -1.0, %v451
          %v545 = vsel %vm529, -1.0, %v452
          %v546 = vsel %vm530, -1.0, %v453
          %v547 = vsel %vm531, -1.0, %v454
          %v548 = vsel %vm532, -1.0, %v455
          %v549 = vsel %vm533, -1.0, %v456
          %v550 = vsel %vm534, -1.0, %v457
          %v551 = vsel %vm535, -1.0, %v458
          %v552 = vmin.f32 %v536, 0.0
          %v553 = vmin.f32 %v537, 0.0
          %v554 = vmin.f32 %v538, 0.0
          %v555 = vmin.f32 %v539, 0.0
          %v556 = vmin.f32 %v540, 0.0
          %v557 = vmin.f32 %v541, 0.0
          %v558 = vmin.f32 %v542, 0.0
          %v559 = vmin.f32 %v543, 0.0
          %v560 = vmin.f32 %v544, 0.0
          %v561 = vmin.f32 %v545, 0.0
          %v562 = vmin.f32 %v546, 0.0
          %v563 = vmin.f32 %v547, 0.0
          %v564 = vmin.f32 %v548, 0.0
          %v565 = vmin.f32 %v549, 0.0
          %v566 = vmin.f32 %v550, 0.0
          %v567 = vmin.f32 %v551, 0.0
          %v568 = vadd.f32 %v552, %v553
          %v569 = vadd.f32 %v568, %v554
          %v570 = vadd.f32 %v569, %v555
          %v571 = vadd.f32 %v570, %v556
          %v572 = vadd.f32 %v571, %v557
          %v573 = vadd.f32 %v572, %v558
          %v574 = vadd.f32 %v573, %v559
          %v575 = vadd.f32 %v574, %v560
          %v576 = vadd.f32 %v575, %v561
          %v577 = vadd.f32 %v576, %v562
          %v578 = vadd.f32 %v577, %v563
          %v579 = vadd.f32 %v578, %v564
          %v580 = vadd.f32 %v579, %v565
          %v581 = vadd.f32 %v580, %v566
          %v582 = vadd.f32 %v581, %v567
          %v583 = vrot.slane %v582, 4
          %v584 = vadd.f32 %v582, %v583
          %v585 = vrot.slane %v584, 2
          %v586 = vadd.f32 %v584, %v585
          %v587 = vrot.slane %v586, 1
          %v588 = vadd.f32 %v586, %v587
          %v589 = vsub.f32 0.0, %v588
          %v590 = vmax.f32 %v536, %v540
          %v591 = vmax.f32 %v537, %v541
          %v592 = vmax.f32 %v538, %v542
          %v593 = vmax.f32 %v539, %v543
          %v594 = vmax.f32 %v590, %v544
          %v595 = vmax.f32 %v591, %v545
          %v596 = vmax.f32 %v592, %v546
          %v597 = vmax.f32 %v593, %v547
          %v598 = vmax.f32 %v594, %v548
          %v599 = vmax.f32 %v595, %v549
          %v600 = vmax.f32 %v596, %v550
          %v601 = vmax.f32 %v597, %v551
          %v602 = vmax.f32 %v598, %v599
          %v603 = vmax.f32 %v600, %v601
          %v604 = vmax.f32 %v602, %v603
          %v605 = vrot.slane %v604, 4
          %v606 = vmax.f32 %v604, %v605
          %v607 = vrot.slane %v606, 2
          %v608 = vmax.f32 %v606, %v607
          %v609 = vrot.slane %v608, 1
          %v610 = vmax.f32 %v608, %v609
          %vm611 = vcmp.lt.f32.partialorder %v589, 16.0
          %v612 = vsel %vm611, %v610, %v519
          %vm613 = vcmp.eq.f32.partialorder %v536, %v610
          %vm614 = vcmp.eq.f32.partialorder %v537, %v610
          %vm615 = vcmp.eq.f32.partialorder %v538, %v610
          %vm616 = vcmp.eq.f32.partialorder %v539, %v610
          %vm617 = vcmp.eq.f32.partialorder %v540, %v610
          %vm618 = vcmp.eq.f32.partialorder %v541, %v610
          %vm619 = vcmp.eq.f32.partialorder %v542, %v610
          %vm620 = vcmp.eq.f32.partialorder %v543, %v610
          %vm621 = vcmp.eq.f32.partialorder %v544, %v610
          %vm622 = vcmp.eq.f32.partialorder %v545, %v610
          %vm623 = vcmp.eq.f32.partialorder %v546, %v610
          %vm624 = vcmp.eq.f32.partialorder %v547, %v610
          %vm625 = vcmp.eq.f32.partialorder %v548, %v610
          %vm626 = vcmp.eq.f32.partialorder %v549, %v610
          %vm627 = vcmp.eq.f32.partialorder %v550, %v610
          %vm628 = vcmp.eq.f32.partialorder %v551, %v610
          %v629 = vsel %vm613, -1.0, %v536
          %v630 = vsel %vm614, -1.0, %v537
          %v631 = vsel %vm615, -1.0, %v538
          %v632 = vsel %vm616, -1.0, %v539
          %v633 = vsel %vm617, -1.0, %v540
          %v634 = vsel %vm618, -1.0, %v541
          %v635 = vsel %vm619, -1.0, %v542
          %v636 = vsel %vm620, -1.0, %v543
          %v637 = vsel %vm621, -1.0, %v544
          %v638 = vsel %vm622, -1.0, %v545
          %v639 = vsel %vm623, -1.0, %v546
          %v640 = vsel %vm624, -1.0, %v547
          %v641 = vsel %vm625, -1.0, %v548
          %v642 = vsel %vm626, -1.0, %v549
          %v643 = vsel %vm627, -1.0, %v550
          %v644 = vsel %vm628, -1.0, %v551
          %v645 = vmin.f32 %v629, 0.0
          %v646 = vmin.f32 %v630, 0.0
          %v647 = vmin.f32 %v631, 0.0
          %v648 = vmin.f32 %v632, 0.0
          %v649 = vmin.f32 %v633, 0.0
          %v650 = vmin.f32 %v634, 0.0
          %v651 = vmin.f32 %v635, 0.0
          %v652 = vmin.f32 %v636, 0.0
          %v653 = vmin.f32 %v637, 0.0
          %v654 = vmin.f32 %v638, 0.0
          %v655 = vmin.f32 %v639, 0.0
          %v656 = vmin.f32 %v640, 0.0
          %v657 = vmin.f32 %v641, 0.0
          %v658 = vmin.f32 %v642, 0.0
          %v659 = vmin.f32 %v643, 0.0
          %v660 = vmin.f32 %v644, 0.0
          %v661 = vadd.f32 %v645, %v646
          %v662 = vadd.f32 %v661, %v647
          %v663 = vadd.f32 %v662, %v648
          %v664 = vadd.f32 %v663, %v649
          %v665 = vadd.f32 %v664, %v650
          %v666 = vadd.f32 %v665, %v651
          %v667 = vadd.f32 %v666, %v652
          %v668 = vadd.f32 %v667, %v653
          %v669 = vadd.f32 %v668, %v654
          %v670 = vadd.f32 %v669, %v655
          %v671 = vadd.f32 %v670, %v656
          %v672 = vadd.f32 %v671, %v657
          %v673 = vadd.f32 %v672, %v658
          %v674 = vadd.f32 %v673, %v659
          %v675 = vadd.f32 %v674, %v660
          %v676 = vrot.slane %v675, 4
          %v677 = vadd.f32 %v675, %v676
          %v678 = vrot.slane %v677, 2
          %v679 = vadd.f32 %v677, %v678
          %v680 = vrot.slane %v679, 1
          %v681 = vadd.f32 %v679, %v680
          %v682 = vsub.f32 0.0, %v681
          %v683 = vmax.f32 %v629, %v633
          %v684 = vmax.f32 %v630, %v634
          %v685 = vmax.f32 %v631, %v635
          %v686 = vmax.f32 %v632, %v636
          %v687 = vmax.f32 %v683, %v637
          %v688 = vmax.f32 %v684, %v638
          %v689 = vmax.f32 %v685, %v639
          %v690 = vmax.f32 %v686, %v640
          %v691 = vmax.f32 %v687, %v641
          %v692 = vmax.f32 %v688, %v642
          %v693 = vmax.f32 %v689, %v643
          %v694 = vmax.f32 %v690, %v644
          %v695 = vmax.f32 %v691, %v692
          %v696 = vmax.f32 %v693, %v694
          %v697 = vmax.f32 %v695, %v696
          %v698 = vrot.slane %v697, 4
          %v699 = vmax.f32 %v697, %v698
          %v700 = vrot.slane %v699, 2
          %v701 = vmax.f32 %v699, %v700
          %v702 = vrot.slane %v701, 1
          %v703 = vmax.f32 %v701, %v702
          %vm704 = vcmp.lt.f32.partialorder %v682, 16.0
          %v705 = vsel %vm704, %v703, %v612
          %vm706 = vcmp.eq.f32.partialorder %v629, %v703
          %vm707 = vcmp.eq.f32.partialorder %v630, %v703
          %vm708 = vcmp.eq.f32.partialorder %v631, %v703
          %vm709 = vcmp.eq.f32.partialorder %v632, %v703
          %vm710 = vcmp.eq.f32.partialorder %v633, %v703
          %vm711 = vcmp.eq.f32.partialorder %v634, %v703
          %vm712 = vcmp.eq.f32.partialorder %v635, %v703
          %vm713 = vcmp.eq.f32.partialorder %v636, %v703
          %vm714 = vcmp.eq.f32.partialorder %v637, %v703
          %vm715 = vcmp.eq.f32.partialorder %v638, %v703
          %vm716 = vcmp.eq.f32.partialorder %v639, %v703
          %vm717 = vcmp.eq.f32.partialorder %v640, %v703
          %vm718 = vcmp.eq.f32.partialorder %v641, %v703
          %vm719 = vcmp.eq.f32.partialorder %v642, %v703
          %vm720 = vcmp.eq.f32.partialorder %v643, %v703
          %vm721 = vcmp.eq.f32.partialorder %v644, %v703
          %v722 = vsel %vm706, -1.0, %v629
          %v723 = vsel %vm707, -1.0, %v630
          %v724 = vsel %vm708, -1.0, %v631
          %v725 = vsel %vm709, -1.0, %v632
          %v726 = vsel %vm710, -1.0, %v633
          %v727 = vsel %vm711, -1.0, %v634
          %v728 = vsel %vm712, -1.0, %v635
          %v729 = vsel %vm713, -1.0, %v636
          %v730 = vsel %vm714, -1.0, %v637
          %v731 = vsel %vm715, -1.0, %v638
          %v732 = vsel %vm716, -1.0, %v639
          %v733 = vsel %vm717, -1.0, %v640
          %v734 = vsel %vm718, -1.0, %v641
          %v735 = vsel %vm719, -1.0, %v642
          %v736 = vsel %vm720, -1.0, %v643
          %v737 = vsel %vm721, -1.0, %v644
          %v738 = vmin.f32 %v722, 0.0
          %v739 = vmin.f32 %v723, 0.0
          %v740 = vmin.f32 %v724, 0.0
          %v741 = vmin.f32 %v725, 0.0
          %v742 = vmin.f32 %v726, 0.0
          %v743 = vmin.f32 %v727, 0.0
          %v744 = vmin.f32 %v728, 0.0
          %v745 = vmin.f32 %v729, 0.0
          %v746 = vmin.f32 %v730, 0.0
          %v747 = vmin.f32 %v731, 0.0
          %v748 = vmin.f32 %v732, 0.0
          %v749 = vmin.f32 %v733, 0.0
          %v750 = vmin.f32 %v734, 0.0
          %v751 = vmin.f32 %v735, 0.0
          %v752 = vmin.f32 %v736, 0.0
          %v753 = vmin.f32 %v737, 0.0
          %v754 = vadd.f32 %v738, %v739
          %v755 = vadd.f32 %v754, %v740
          %v756 = vadd.f32 %v755, %v741
          %v757 = vadd.f32 %v756, %v742
          %v758 = vadd.f32 %v757, %v743
          %v759 = vadd.f32 %v758, %v744
          %v760 = vadd.f32 %v759, %v745
          %v761 = vadd.f32 %v760, %v746
          %v762 = vadd.f32 %v761, %v747
          %v763 = vadd.f32 %v762, %v748
          %v764 = vadd.f32 %v763, %v749
          %v765 = vadd.f32 %v764, %v750
          %v766 = vadd.f32 %v765, %v751
          %v767 = vadd.f32 %v766, %v752
          %v768 = vadd.f32 %v767, %v753
          %v769 = vrot.slane %v768, 4
          %v770 = vadd.f32 %v768, %v769
          %v771 = vrot.slane %v770, 2
          %v772 = vadd.f32 %v770, %v771
          %v773 = vrot.slane %v772, 1
          %v774 = vadd.f32 %v772, %v773
          %v775 = vsub.f32 0.0, %v774
          %v776 = vmax.f32 %v722, %v726
          %v777 = vmax.f32 %v723, %v727
          %v778 = vmax.f32 %v724, %v728
          %v779 = vmax.f32 %v725, %v729
          %v780 = vmax.f32 %v776, %v730
          %v781 = vmax.f32 %v777, %v731
          %v782 = vmax.f32 %v778, %v732
          %v783 = vmax.f32 %v779, %v733
          %v784 = vmax.f32 %v780, %v734
          %v785 = vmax.f32 %v781, %v735
          %v786 = vmax.f32 %v782, %v736
          %v787 = vmax.f32 %v783, %v737
          %v788 = vmax.f32 %v784, %v785
          %v789 = vmax.f32 %v786, %v787
          %v790 = vmax.f32 %v788, %v789
          %v791 = vrot.slane %v790, 4
          %v792 = vmax.f32 %v790, %v791
          %v793 = vrot.slane %v792, 2
          %v794 = vmax.f32 %v792, %v793
          %v795 = vrot.slane %v794, 1
          %v796 = vmax.f32 %v794, %v795
          %vm797 = vcmp.lt.f32.partialorder %v775, 16.0
          %v798 = vsel %vm797, %v796, %v705
          %vm799 = vcmp.eq.f32.partialorder %v722, %v796
          %vm800 = vcmp.eq.f32.partialorder %v723, %v796
          %vm801 = vcmp.eq.f32.partialorder %v724, %v796
          %vm802 = vcmp.eq.f32.partialorder %v725, %v796
          %vm803 = vcmp.eq.f32.partialorder %v726, %v796
          %vm804 = vcmp.eq.f32.partialorder %v727, %v796
          %vm805 = vcmp.eq.f32.partialorder %v728, %v796
          %vm806 = vcmp.eq.f32.partialorder %v729, %v796
          %vm807 = vcmp.eq.f32.partialorder %v730, %v796
          %vm808 = vcmp.eq.f32.partialorder %v731, %v796
          %vm809 = vcmp.eq.f32.partialorder %v732, %v796
          %vm810 = vcmp.eq.f32.partialorder %v733, %v796
          %vm811 = vcmp.eq.f32.partialorder %v734, %v796
          %vm812 = vcmp.eq.f32.partialorder %v735, %v796
          %vm813 = vcmp.eq.f32.partialorder %v736, %v796
          %vm814 = vcmp.eq.f32.partialorder %v737, %v796
          %v815 = vsel %vm799, -1.0, %v722
          %v816 = vsel %vm800, -1.0, %v723
          %v817 = vsel %vm801, -1.0, %v724
          %v818 = vsel %vm802, -1.0, %v725
          %v819 = vsel %vm803, -1.0, %v726
          %v820 = vsel %vm804, -1.0, %v727
          %v821 = vsel %vm805, -1.0, %v728
          %v822 = vsel %vm806, -1.0, %v729
          %v823 = vsel %vm807, -1.0, %v730
          %v824 = vsel %vm808, -1.0, %v731
          %v825 = vsel %vm809, -1.0, %v732
          %v826 = vsel %vm810, -1.0, %v733
          %v827 = vsel %vm811, -1.0, %v734
          %v828 = vsel %vm812, -1.0, %v735
          %v829 = vsel %vm813, -1.0, %v736
          %v830 = vsel %vm814, -1.0, %v737
          %v831 = vmin.f32 %v815, 0.0
          %v832 = vmin.f32 %v816, 0.0
          %v833 = vmin.f32 %v817, 0.0
          %v834 = vmin.f32 %v818, 0.0
          %v835 = vmin.f32 %v819, 0.0
          %v836 = vmin.f32 %v820, 0.0
          %v837 = vmin.f32 %v821, 0.0
          %v838 = vmin.f32 %v822, 0.0
          %v839 = vmin.f32 %v823, 0.0
          %v840 = vmin.f32 %v824, 0.0
          %v841 = vmin.f32 %v825, 0.0
          %v842 = vmin.f32 %v826, 0.0
          %v843 = vmin.f32 %v827, 0.0
          %v844 = vmin.f32 %v828, 0.0
          %v845 = vmin.f32 %v829, 0.0
          %v846 = vmin.f32 %v830, 0.0
          %v847 = vadd.f32 %v831, %v832
          %v848 = vadd.f32 %v847, %v833
          %v849 = vadd.f32 %v848, %v834
          %v850 = vadd.f32 %v849, %v835
          %v851 = vadd.f32 %v850, %v836
          %v852 = vadd.f32 %v851, %v837
          %v853 = vadd.f32 %v852, %v838
          %v854 = vadd.f32 %v853, %v839
          %v855 = vadd.f32 %v854, %v840
          %v856 = vadd.f32 %v855, %v841
          %v857 = vadd.f32 %v856, %v842
          %v858 = vadd.f32 %v857, %v843
          %v859 = vadd.f32 %v858, %v844
          %v860 = vadd.f32 %v859, %v845
          %v861 = vadd.f32 %v860, %v846
          %v862 = vrot.slane %v861, 4
          %v863 = vadd.f32 %v861, %v862
          %v864 = vrot.slane %v863, 2
          %v865 = vadd.f32 %v863, %v864
          %v866 = vrot.slane %v865, 1
          %v867 = vadd.f32 %v865, %v866
          %v868 = vsub.f32 0.0, %v867
          %v869 = vmax.f32 %v815, %v819
          %v870 = vmax.f32 %v816, %v820
          %v871 = vmax.f32 %v817, %v821
          %v872 = vmax.f32 %v818, %v822
          %v873 = vmax.f32 %v869, %v823
          %v874 = vmax.f32 %v870, %v824
          %v875 = vmax.f32 %v871, %v825
          %v876 = vmax.f32 %v872, %v826
          %v877 = vmax.f32 %v873, %v827
          %v878 = vmax.f32 %v874, %v828
          %v879 = vmax.f32 %v875, %v829
          %v880 = vmax.f32 %v876, %v830
          %v881 = vmax.f32 %v877, %v878
          %v882 = vmax.f32 %v879, %v880
          %v883 = vmax.f32 %v881, %v882
          %v884 = vrot.slane %v883, 4
          %v885 = vmax.f32 %v883, %v884
          %v886 = vrot.slane %v885, 2
          %v887 = vmax.f32 %v885, %v886
          %v888 = vrot.slane %v887, 1
          %v889 = vmax.f32 %v887, %v888
          %vm890 = vcmp.lt.f32.partialorder %v868, 16.0
          %v891 = vsel %vm890, %v889, %v798
          %vm892 = vcmp.eq.f32.partialorder %v815, %v889
          %vm893 = vcmp.eq.f32.partialorder %v816, %v889
          %vm894 = vcmp.eq.f32.partialorder %v817, %v889
          %vm895 = vcmp.eq.f32.partialorder %v818, %v889
          %vm896 = vcmp.eq.f32.partialorder %v819, %v889
          %vm897 = vcmp.eq.f32.partialorder %v820, %v889
          %vm898 = vcmp.eq.f32.partialorder %v821, %v889
          %vm899 = vcmp.eq.f32.partialorder %v822, %v889
          %vm900 = vcmp.eq.f32.partialorder %v823, %v889
          %vm901 = vcmp.eq.f32.partialorder %v824, %v889
          %vm902 = vcmp.eq.f32.partialorder %v825, %v889
          %vm903 = vcmp.eq.f32.partialorder %v826, %v889
          %vm904 = vcmp.eq.f32.partialorder %v827, %v889
          %vm905 = vcmp.eq.f32.partialorder %v828, %v889
          %vm906 = vcmp.eq.f32.partialorder %v829, %v889
          %vm907 = vcmp.eq.f32.partialorder %v830, %v889
          %v908 = vsel %vm892, -1.0, %v815
          %v909 = vsel %vm893, -1.0, %v816
          %v910 = vsel %vm894, -1.0, %v817
          %v911 = vsel %vm895, -1.0, %v818
          %v912 = vsel %vm896, -1.0, %v819
          %v913 = vsel %vm897, -1.0, %v820
          %v914 = vsel %vm898, -1.0, %v821
          %v915 = vsel %vm899, -1.0, %v822
          %v916 = vsel %vm900, -1.0, %v823
          %v917 = vsel %vm901, -1.0, %v824
          %v918 = vsel %vm902, -1.0, %v825
          %v919 = vsel %vm903, -1.0, %v826
          %v920 = vsel %vm904, -1.0, %v827
          %v921 = vsel %vm905, -1.0, %v828
          %v922 = vsel %vm906, -1.0, %v829
          %v923 = vsel %vm907, -1.0, %v830
          %v924 = vmin.f32 %v908, 0.0
          %v925 = vmin.f32 %v909, 0.0
          %v926 = vmin.f32 %v910, 0.0
          %v927 = vmin.f32 %v911, 0.0
          %v928 = vmin.f32 %v912, 0.0
          %v929 = vmin.f32 %v913, 0.0
          %v930 = vmin.f32 %v914, 0.0
          %v931 = vmin.f32 %v915, 0.0
          %v932 = vmin.f32 %v916, 0.0
          %v933 = vmin.f32 %v917, 0.0
          %v934 = vmin.f32 %v918, 0.0
          %v935 = vmin.f32 %v919, 0.0
          %v936 = vmin.f32 %v920, 0.0
          %v937 = vmin.f32 %v921, 0.0
          %v938 = vmin.f32 %v922, 0.0
          %v939 = vmin.f32 %v923, 0.0
          %v940 = vadd.f32 %v924, %v925
          %v941 = vadd.f32 %v940, %v926
          %v942 = vadd.f32 %v941, %v927
          %v943 = vadd.f32 %v942, %v928
          %v944 = vadd.f32 %v943, %v929
          %v945 = vadd.f32 %v944, %v930
          %v946 = vadd.f32 %v945, %v931
          %v947 = vadd.f32 %v946, %v932
          %v948 = vadd.f32 %v947, %v933
          %v949 = vadd.f32 %v948, %v934
          %v950 = vadd.f32 %v949, %v935
          %v951 = vadd.f32 %v950, %v936
          %v952 = vadd.f32 %v951, %v937
          %v953 = vadd.f32 %v952, %v938
          %v954 = vadd.f32 %v953, %v939
          %v955 = vrot.slane %v954, 4
          %v956 = vadd.f32 %v954, %v955
          %v957 = vrot.slane %v956, 2
          %v958 = vadd.f32 %v956, %v957
          %v959 = vrot.slane %v958, 1
          %v960 = vadd.f32 %v958, %v959
          %v961 = vsub.f32 0.0, %v960
          %v962 = vmax.f32 %v908, %v912
          %v963 = vmax.f32 %v909, %v913
          %v964 = vmax.f32 %v910, %v914
          %v965 = vmax.f32 %v911, %v915
          %v966 = vmax.f32 %v962, %v916
          %v967 = vmax.f32 %v963, %v917
          %v968 = vmax.f32 %v964, %v918
          %v969 = vmax.f32 %v965, %v919
          %v970 = vmax.f32 %v966, %v920
          %v971 = vmax.f32 %v967, %v921
          %v972 = vmax.f32 %v968, %v922
          %v973 = vmax.f32 %v969, %v923
          %v974 = vmax.f32 %v970, %v971
          %v975 = vmax.f32 %v972, %v973
          %v976 = vmax.f32 %v974, %v975
          %v977 = vrot.slane %v976, 4
          %v978 = vmax.f32 %v976, %v977
          %v979 = vrot.slane %v978, 2
          %v980 = vmax.f32 %v978, %v979
          %v981 = vrot.slane %v980, 1
          %v982 = vmax.f32 %v980, %v981
          %vm983 = vcmp.lt.f32.partialorder %v961, 16.0
          %v984 = vsel %vm983, %v982, %v891
          %vm985 = vcmp.eq.f32.partialorder %v908, %v982
          %vm986 = vcmp.eq.f32.partialorder %v909, %v982
          %vm987 = vcmp.eq.f32.partialorder %v910, %v982
          %vm988 = vcmp.eq.f32.partialorder %v911, %v982
          %vm989 = vcmp.eq.f32.partialorder %v912, %v982
          %vm990 = vcmp.eq.f32.partialorder %v913, %v982
          %vm991 = vcmp.eq.f32.partialorder %v914, %v982
          %vm992 = vcmp.eq.f32.partialorder %v915, %v982
          %vm993 = vcmp.eq.f32.partialorder %v916, %v982
          %vm994 = vcmp.eq.f32.partialorder %v917, %v982
          %vm995 = vcmp.eq.f32.partialorder %v918, %v982
          %vm996 = vcmp.eq.f32.partialorder %v919, %v982
          %vm997 = vcmp.eq.f32.partialorder %v920, %v982
          %vm998 = vcmp.eq.f32.partialorder %v921, %v982
          %vm999 = vcmp.eq.f32.partialorder %v922, %v982
          %vm1000 = vcmp.eq.f32.partialorder %v923, %v982
          %v1001 = vsel %vm985, -1.0, %v908
          %v1002 = vsel %vm986, -1.0, %v909
          %v1003 = vsel %vm987, -1.0, %v910
          %v1004 = vsel %vm988, -1.0, %v911
          %v1005 = vsel %vm989, -1.0, %v912
          %v1006 = vsel %vm990, -1.0, %v913
          %v1007 = vsel %vm991, -1.0, %v914
          %v1008 = vsel %vm992, -1.0, %v915
          %v1009 = vsel %vm993, -1.0, %v916
          %v1010 = vsel %vm994, -1.0, %v917
          %v1011 = vsel %vm995, -1.0, %v918
          %v1012 = vsel %vm996, -1.0, %v919
          %v1013 = vsel %vm997, -1.0, %v920
          %v1014 = vsel %vm998, -1.0, %v921
          %v1015 = vsel %vm999, -1.0, %v922
          %v1016 = vsel %vm1000, -1.0, %v923
          %v1017 = vmin.f32 %v1001, 0.0
          %v1018 = vmin.f32 %v1002, 0.0
          %v1019 = vmin.f32 %v1003, 0.0
          %v1020 = vmin.f32 %v1004, 0.0
          %v1021 = vmin.f32 %v1005, 0.0
          %v1022 = vmin.f32 %v1006, 0.0
          %v1023 = vmin.f32 %v1007, 0.0
          %v1024 = vmin.f32 %v1008, 0.0
          %v1025 = vmin.f32 %v1009, 0.0
          %v1026 = vmin.f32 %v1010, 0.0
          %v1027 = vmin.f32 %v1011, 0.0
          %v1028 = vmin.f32 %v1012, 0.0
          %v1029 = vmin.f32 %v1013, 0.0
          %v1030 = vmin.f32 %v1014, 0.0
          %v1031 = vmin.f32 %v1015, 0.0
          %v1032 = vmin.f32 %v1016, 0.0
          %v1033 = vadd.f32 %v1017, %v1018
          %v1034 = vadd.f32 %v1033, %v1019
          %v1035 = vadd.f32 %v1034, %v1020
          %v1036 = vadd.f32 %v1035, %v1021
          %v1037 = vadd.f32 %v1036, %v1022
          %v1038 = vadd.f32 %v1037, %v1023
          %v1039 = vadd.f32 %v1038, %v1024
          %v1040 = vadd.f32 %v1039, %v1025
          %v1041 = vadd.f32 %v1040, %v1026
          %v1042 = vadd.f32 %v1041, %v1027
          %v1043 = vadd.f32 %v1042, %v1028
          %v1044 = vadd.f32 %v1043, %v1029
          %v1045 = vadd.f32 %v1044, %v1030
          %v1046 = vadd.f32 %v1045, %v1031
          %v1047 = vadd.f32 %v1046, %v1032
          %v1048 = vrot.slane %v1047, 4
          %v1049 = vadd.f32 %v1047, %v1048
          %v1050 = vrot.slane %v1049, 2
          %v1051 = vadd.f32 %v1049, %v1050
          %v1052 = vrot.slane %v1051, 1
          %v1053 = vadd.f32 %v1051, %v1052
          %v1054 = vsub.f32 0.0, %v1053
          %v1055 = vmax.f32 %v1001, %v1005
          %v1056 = vmax.f32 %v1002, %v1006
          %v1057 = vmax.f32 %v1003, %v1007
          %v1058 = vmax.f32 %v1004, %v1008
          %v1059 = vmax.f32 %v1055, %v1009
          %v1060 = vmax.f32 %v1056, %v1010
          %v1061 = vmax.f32 %v1057, %v1011
          %v1062 = vmax.f32 %v1058, %v1012
          %v1063 = vmax.f32 %v1059, %v1013
          %v1064 = vmax.f32 %v1060, %v1014
          %v1065 = vmax.f32 %v1061, %v1015
          %v1066 = vmax.f32 %v1062, %v1016
          %v1067 = vmax.f32 %v1063, %v1064
          %v1068 = vmax.f32 %v1065, %v1066
          %v1069 = vmax.f32 %v1067, %v1068
          %v1070 = vrot.slane %v1069, 4
          %v1071 = vmax.f32 %v1069, %v1070
          %v1072 = vrot.slane %v1071, 2
          %v1073 = vmax.f32 %v1071, %v1072
          %v1074 = vrot.slane %v1073, 1
          %v1075 = vmax.f32 %v1073, %v1074
          %vm1076 = vcmp.lt.f32.partialorder %v1054, 16.0
          %v1077 = vsel %vm1076, %v1075, %v984
          %vm1078 = vcmp.eq.f32.partialorder %v1001, %v1075
          %vm1079 = vcmp.eq.f32.partialorder %v1002, %v1075
          %vm1080 = vcmp.eq.f32.partialorder %v1003, %v1075
          %vm1081 = vcmp.eq.f32.partialorder %v1004, %v1075
          %vm1082 = vcmp.eq.f32.partialorder %v1005, %v1075
          %vm1083 = vcmp.eq.f32.partialorder %v1006, %v1075
          %vm1084 = vcmp.eq.f32.partialorder %v1007, %v1075
          %vm1085 = vcmp.eq.f32.partialorder %v1008, %v1075
          %vm1086 = vcmp.eq.f32.partialorder %v1009, %v1075
          %vm1087 = vcmp.eq.f32.partialorder %v1010, %v1075
          %vm1088 = vcmp.eq.f32.partialorder %v1011, %v1075
          %vm1089 = vcmp.eq.f32.partialorder %v1012, %v1075
          %vm1090 = vcmp.eq.f32.partialorder %v1013, %v1075
          %vm1091 = vcmp.eq.f32.partialorder %v1014, %v1075
          %vm1092 = vcmp.eq.f32.partialorder %v1015, %v1075
          %vm1093 = vcmp.eq.f32.partialorder %v1016, %v1075
          %v1094 = vsel %vm1078, -1.0, %v1001
          %v1095 = vsel %vm1079, -1.0, %v1002
          %v1096 = vsel %vm1080, -1.0, %v1003
          %v1097 = vsel %vm1081, -1.0, %v1004
          %v1098 = vsel %vm1082, -1.0, %v1005
          %v1099 = vsel %vm1083, -1.0, %v1006
          %v1100 = vsel %vm1084, -1.0, %v1007
          %v1101 = vsel %vm1085, -1.0, %v1008
          %v1102 = vsel %vm1086, -1.0, %v1009
          %v1103 = vsel %vm1087, -1.0, %v1010
          %v1104 = vsel %vm1088, -1.0, %v1011
          %v1105 = vsel %vm1089, -1.0, %v1012
          %v1106 = vsel %vm1090, -1.0, %v1013
          %v1107 = vsel %vm1091, -1.0, %v1014
          %v1108 = vsel %vm1092, -1.0, %v1015
          %v1109 = vsel %vm1093, -1.0, %v1016
          %v1110 = vmin.f32 %v1094, 0.0
          %v1111 = vmin.f32 %v1095, 0.0
          %v1112 = vmin.f32 %v1096, 0.0
          %v1113 = vmin.f32 %v1097, 0.0
          %v1114 = vmin.f32 %v1098, 0.0
          %v1115 = vmin.f32 %v1099, 0.0
          %v1116 = vmin.f32 %v1100, 0.0
          %v1117 = vmin.f32 %v1101, 0.0
          %v1118 = vmin.f32 %v1102, 0.0
          %v1119 = vmin.f32 %v1103, 0.0
          %v1120 = vmin.f32 %v1104, 0.0
          %v1121 = vmin.f32 %v1105, 0.0
          %v1122 = vmin.f32 %v1106, 0.0
          %v1123 = vmin.f32 %v1107, 0.0
          %v1124 = vmin.f32 %v1108, 0.0
          %v1125 = vmin.f32 %v1109, 0.0
          %v1126 = vadd.f32 %v1110, %v1111
          %v1127 = vadd.f32 %v1126, %v1112
          %v1128 = vadd.f32 %v1127, %v1113
          %v1129 = vadd.f32 %v1128, %v1114
          %v1130 = vadd.f32 %v1129, %v1115
          %v1131 = vadd.f32 %v1130, %v1116
          %v1132 = vadd.f32 %v1131, %v1117
          %v1133 = vadd.f32 %v1132, %v1118
          %v1134 = vadd.f32 %v1133, %v1119
          %v1135 = vadd.f32 %v1134, %v1120
          %v1136 = vadd.f32 %v1135, %v1121
          %v1137 = vadd.f32 %v1136, %v1122
          %v1138 = vadd.f32 %v1137, %v1123
          %v1139 = vadd.f32 %v1138, %v1124
          %v1140 = vadd.f32 %v1139, %v1125
          %v1141 = vrot.slane %v1140, 4
          %v1142 = vadd.f32 %v1140, %v1141
          %v1143 = vrot.slane %v1142, 2
          %v1144 = vadd.f32 %v1142, %v1143
          %v1145 = vrot.slane %v1144, 1
          %v1146 = vadd.f32 %v1144, %v1145
          %v1147 = vsub.f32 0.0, %v1146
          %v1148 = vmax.f32 %v1094, %v1098
          %v1149 = vmax.f32 %v1095, %v1099
          %v1150 = vmax.f32 %v1096, %v1100
          %v1151 = vmax.f32 %v1097, %v1101
          %v1152 = vmax.f32 %v1148, %v1102
          %v1153 = vmax.f32 %v1149, %v1103
          %v1154 = vmax.f32 %v1150, %v1104
          %v1155 = vmax.f32 %v1151, %v1105
          %v1156 = vmax.f32 %v1152, %v1106
          %v1157 = vmax.f32 %v1153, %v1107
          %v1158 = vmax.f32 %v1154, %v1108
          %v1159 = vmax.f32 %v1155, %v1109
          %v1160 = vmax.f32 %v1156, %v1157
          %v1161 = vmax.f32 %v1158, %v1159
          %v1162 = vmax.f32 %v1160, %v1161
          %v1163 = vrot.slane %v1162, 4
          %v1164 = vmax.f32 %v1162, %v1163
          %v1165 = vrot.slane %v1164, 2
          %v1166 = vmax.f32 %v1164, %v1165
          %v1167 = vrot.slane %v1166, 1
          %v1168 = vmax.f32 %v1166, %v1167
          %vm1169 = vcmp.lt.f32.partialorder %v1147, 16.0
          %v1170 = vsel %vm1169, %v1168, %v1077
          %vm1171 = vcmp.eq.f32.partialorder %v1094, %v1168
          %vm1172 = vcmp.eq.f32.partialorder %v1095, %v1168
          %vm1173 = vcmp.eq.f32.partialorder %v1096, %v1168
          %vm1174 = vcmp.eq.f32.partialorder %v1097, %v1168
          %vm1175 = vcmp.eq.f32.partialorder %v1098, %v1168
          %vm1176 = vcmp.eq.f32.partialorder %v1099, %v1168
          %vm1177 = vcmp.eq.f32.partialorder %v1100, %v1168
          %vm1178 = vcmp.eq.f32.partialorder %v1101, %v1168
          %vm1179 = vcmp.eq.f32.partialorder %v1102, %v1168
          %vm1180 = vcmp.eq.f32.partialorder %v1103, %v1168
          %vm1181 = vcmp.eq.f32.partialorder %v1104, %v1168
          %vm1182 = vcmp.eq.f32.partialorder %v1105, %v1168
          %vm1183 = vcmp.eq.f32.partialorder %v1106, %v1168
          %vm1184 = vcmp.eq.f32.partialorder %v1107, %v1168
          %vm1185 = vcmp.eq.f32.partialorder %v1108, %v1168
          %vm1186 = vcmp.eq.f32.partialorder %v1109, %v1168
          %v1187 = vsel %vm1171, -1.0, %v1094
          %v1188 = vsel %vm1172, -1.0, %v1095
          %v1189 = vsel %vm1173, -1.0, %v1096
          %v1190 = vsel %vm1174, -1.0, %v1097
          %v1191 = vsel %vm1175, -1.0, %v1098
          %v1192 = vsel %vm1176, -1.0, %v1099
          %v1193 = vsel %vm1177, -1.0, %v1100
          %v1194 = vsel %vm1178, -1.0, %v1101
          %v1195 = vsel %vm1179, -1.0, %v1102
          %v1196 = vsel %vm1180, -1.0, %v1103
          %v1197 = vsel %vm1181, -1.0, %v1104
          %v1198 = vsel %vm1182, -1.0, %v1105
          %v1199 = vsel %vm1183, -1.0, %v1106
          %v1200 = vsel %vm1184, -1.0, %v1107
          %v1201 = vsel %vm1185, -1.0, %v1108
          %v1202 = vsel %vm1186, -1.0, %v1109
          %v1203 = vmin.f32 %v1187, 0.0
          %v1204 = vmin.f32 %v1188, 0.0
          %v1205 = vmin.f32 %v1189, 0.0
          %v1206 = vmin.f32 %v1190, 0.0
          %v1207 = vmin.f32 %v1191, 0.0
          %v1208 = vmin.f32 %v1192, 0.0
          %v1209 = vmin.f32 %v1193, 0.0
          %v1210 = vmin.f32 %v1194, 0.0
          %v1211 = vmin.f32 %v1195, 0.0
          %v1212 = vmin.f32 %v1196, 0.0
          %v1213 = vmin.f32 %v1197, 0.0
          %v1214 = vmin.f32 %v1198, 0.0
          %v1215 = vmin.f32 %v1199, 0.0
          %v1216 = vmin.f32 %v1200, 0.0
          %v1217 = vmin.f32 %v1201, 0.0
          %v1218 = vmin.f32 %v1202, 0.0
          %v1219 = vadd.f32 %v1203, %v1204
          %v1220 = vadd.f32 %v1219, %v1205
          %v1221 = vadd.f32 %v1220, %v1206
          %v1222 = vadd.f32 %v1221, %v1207
          %v1223 = vadd.f32 %v1222, %v1208
          %v1224 = vadd.f32 %v1223, %v1209
          %v1225 = vadd.f32 %v1224, %v1210
          %v1226 = vadd.f32 %v1225, %v1211
          %v1227 = vadd.f32 %v1226, %v1212
          %v1228 = vadd.f32 %v1227, %v1213
          %v1229 = vadd.f32 %v1228, %v1214
          %v1230 = vadd.f32 %v1229, %v1215
          %v1231 = vadd.f32 %v1230, %v1216
          %v1232 = vadd.f32 %v1231, %v1217
          %v1233 = vadd.f32 %v1232, %v1218
          %v1234 = vrot.slane %v1233, 4
          %v1235 = vadd.f32 %v1233, %v1234
          %v1236 = vrot.slane %v1235, 2
          %v1237 = vadd.f32 %v1235, %v1236
          %v1238 = vrot.slane %v1237, 1
          %v1239 = vadd.f32 %v1237, %v1238
          %v1240 = vsub.f32 0.0, %v1239
          %v1241 = vmax.f32 %v1187, %v1191
          %v1242 = vmax.f32 %v1188, %v1192
          %v1243 = vmax.f32 %v1189, %v1193
          %v1244 = vmax.f32 %v1190, %v1194
          %v1245 = vmax.f32 %v1241, %v1195
          %v1246 = vmax.f32 %v1242, %v1196
          %v1247 = vmax.f32 %v1243, %v1197
          %v1248 = vmax.f32 %v1244, %v1198
          %v1249 = vmax.f32 %v1245, %v1199
          %v1250 = vmax.f32 %v1246, %v1200
          %v1251 = vmax.f32 %v1247, %v1201
          %v1252 = vmax.f32 %v1248, %v1202
          %v1253 = vmax.f32 %v1249, %v1250
          %v1254 = vmax.f32 %v1251, %v1252
          %v1255 = vmax.f32 %v1253, %v1254
          %v1256 = vrot.slane %v1255, 4
          %v1257 = vmax.f32 %v1255, %v1256
          %v1258 = vrot.slane %v1257, 2
          %v1259 = vmax.f32 %v1257, %v1258
          %v1260 = vrot.slane %v1259, 1
          %v1261 = vmax.f32 %v1259, %v1260
          %vm1262 = vcmp.lt.f32.partialorder %v1240, 16.0
          %v1263 = vsel %vm1262, %v1261, %v1170
          %vm1264 = vcmp.eq.f32.partialorder %v1187, %v1261
          %vm1265 = vcmp.eq.f32.partialorder %v1188, %v1261
          %vm1266 = vcmp.eq.f32.partialorder %v1189, %v1261
          %vm1267 = vcmp.eq.f32.partialorder %v1190, %v1261
          %vm1268 = vcmp.eq.f32.partialorder %v1191, %v1261
          %vm1269 = vcmp.eq.f32.partialorder %v1192, %v1261
          %vm1270 = vcmp.eq.f32.partialorder %v1193, %v1261
          %vm1271 = vcmp.eq.f32.partialorder %v1194, %v1261
          %vm1272 = vcmp.eq.f32.partialorder %v1195, %v1261
          %vm1273 = vcmp.eq.f32.partialorder %v1196, %v1261
          %vm1274 = vcmp.eq.f32.partialorder %v1197, %v1261
          %vm1275 = vcmp.eq.f32.partialorder %v1198, %v1261
          %vm1276 = vcmp.eq.f32.partialorder %v1199, %v1261
          %vm1277 = vcmp.eq.f32.partialorder %v1200, %v1261
          %vm1278 = vcmp.eq.f32.partialorder %v1201, %v1261
          %vm1279 = vcmp.eq.f32.partialorder %v1202, %v1261
          %v1280 = vsel %vm1264, -1.0, %v1187
          %v1281 = vsel %vm1265, -1.0, %v1188
          %v1282 = vsel %vm1266, -1.0, %v1189
          %v1283 = vsel %vm1267, -1.0, %v1190
          %v1284 = vsel %vm1268, -1.0, %v1191
          %v1285 = vsel %vm1269, -1.0, %v1192
          %v1286 = vsel %vm1270, -1.0, %v1193
          %v1287 = vsel %vm1271, -1.0, %v1194
          %v1288 = vsel %vm1272, -1.0, %v1195
          %v1289 = vsel %vm1273, -1.0, %v1196
          %v1290 = vsel %vm1274, -1.0, %v1197
          %v1291 = vsel %vm1275, -1.0, %v1198
          %v1292 = vsel %vm1276, -1.0, %v1199
          %v1293 = vsel %vm1277, -1.0, %v1200
          %v1294 = vsel %vm1278, -1.0, %v1201
          %v1295 = vsel %vm1279, -1.0, %v1202
          %v1296 = vmin.f32 %v1280, 0.0
          %v1297 = vmin.f32 %v1281, 0.0
          %v1298 = vmin.f32 %v1282, 0.0
          %v1299 = vmin.f32 %v1283, 0.0
          %v1300 = vmin.f32 %v1284, 0.0
          %v1301 = vmin.f32 %v1285, 0.0
          %v1302 = vmin.f32 %v1286, 0.0
          %v1303 = vmin.f32 %v1287, 0.0
          %v1304 = vmin.f32 %v1288, 0.0
          %v1305 = vmin.f32 %v1289, 0.0
          %v1306 = vmin.f32 %v1290, 0.0
          %v1307 = vmin.f32 %v1291, 0.0
          %v1308 = vmin.f32 %v1292, 0.0
          %v1309 = vmin.f32 %v1293, 0.0
          %v1310 = vmin.f32 %v1294, 0.0
          %v1311 = vmin.f32 %v1295, 0.0
          %v1312 = vadd.f32 %v1296, %v1297
          %v1313 = vadd.f32 %v1312, %v1298
          %v1314 = vadd.f32 %v1313, %v1299
          %v1315 = vadd.f32 %v1314, %v1300
          %v1316 = vadd.f32 %v1315, %v1301
          %v1317 = vadd.f32 %v1316, %v1302
          %v1318 = vadd.f32 %v1317, %v1303
          %v1319 = vadd.f32 %v1318, %v1304
          %v1320 = vadd.f32 %v1319, %v1305
          %v1321 = vadd.f32 %v1320, %v1306
          %v1322 = vadd.f32 %v1321, %v1307
          %v1323 = vadd.f32 %v1322, %v1308
          %v1324 = vadd.f32 %v1323, %v1309
          %v1325 = vadd.f32 %v1324, %v1310
          %v1326 = vadd.f32 %v1325, %v1311
          %v1327 = vrot.slane %v1326, 4
          %v1328 = vadd.f32 %v1326, %v1327
          %v1329 = vrot.slane %v1328, 2
          %v1330 = vadd.f32 %v1328, %v1329
          %v1331 = vrot.slane %v1330, 1
          %v1332 = vadd.f32 %v1330, %v1331
          %v1333 = vsub.f32 0.0, %v1332
          %v1334 = vmax.f32 %v1280, %v1284
          %v1335 = vmax.f32 %v1281, %v1285
          %v1336 = vmax.f32 %v1282, %v1286
          %v1337 = vmax.f32 %v1283, %v1287
          %v1338 = vmax.f32 %v1334, %v1288
          %v1339 = vmax.f32 %v1335, %v1289
          %v1340 = vmax.f32 %v1336, %v1290
          %v1341 = vmax.f32 %v1337, %v1291
          %v1342 = vmax.f32 %v1338, %v1292
          %v1343 = vmax.f32 %v1339, %v1293
          %v1344 = vmax.f32 %v1340, %v1294
          %v1345 = vmax.f32 %v1341, %v1295
          %v1346 = vmax.f32 %v1342, %v1343
          %v1347 = vmax.f32 %v1344, %v1345
          %v1348 = vmax.f32 %v1346, %v1347
          %v1349 = vrot.slane %v1348, 4
          %v1350 = vmax.f32 %v1348, %v1349
          %v1351 = vrot.slane %v1350, 2
          %v1352 = vmax.f32 %v1350, %v1351
          %v1353 = vrot.slane %v1352, 1
          %v1354 = vmax.f32 %v1352, %v1353
          %vm1355 = vcmp.lt.f32.partialorder %v1333, 16.0
          %v1356 = vsel %vm1355, %v1354, %v1263
          %vm1357 = vcmp.eq.f32.partialorder %v1280, %v1354
          %vm1358 = vcmp.eq.f32.partialorder %v1281, %v1354
          %vm1359 = vcmp.eq.f32.partialorder %v1282, %v1354
          %vm1360 = vcmp.eq.f32.partialorder %v1283, %v1354
          %vm1361 = vcmp.eq.f32.partialorder %v1284, %v1354
          %vm1362 = vcmp.eq.f32.partialorder %v1285, %v1354
          %vm1363 = vcmp.eq.f32.partialorder %v1286, %v1354
          %vm1364 = vcmp.eq.f32.partialorder %v1287, %v1354
          %vm1365 = vcmp.eq.f32.partialorder %v1288, %v1354
          %vm1366 = vcmp.eq.f32.partialorder %v1289, %v1354
          %vm1367 = vcmp.eq.f32.partialorder %v1290, %v1354
          %vm1368 = vcmp.eq.f32.partialorder %v1291, %v1354
          %vm1369 = vcmp.eq.f32.partialorder %v1292, %v1354
          %vm1370 = vcmp.eq.f32.partialorder %v1293, %v1354
          %vm1371 = vcmp.eq.f32.partialorder %v1294, %v1354
          %vm1372 = vcmp.eq.f32.partialorder %v1295, %v1354
          %v1373 = vsel %vm1357, -1.0, %v1280
          %v1374 = vsel %vm1358, -1.0, %v1281
          %v1375 = vsel %vm1359, -1.0, %v1282
          %v1376 = vsel %vm1360, -1.0, %v1283
          %v1377 = vsel %vm1361, -1.0, %v1284
          %v1378 = vsel %vm1362, -1.0, %v1285
          %v1379 = vsel %vm1363, -1.0, %v1286
          %v1380 = vsel %vm1364, -1.0, %v1287
          %v1381 = vsel %vm1365, -1.0, %v1288
          %v1382 = vsel %vm1366, -1.0, %v1289
          %v1383 = vsel %vm1367, -1.0, %v1290
          %v1384 = vsel %vm1368, -1.0, %v1291
          %v1385 = vsel %vm1369, -1.0, %v1292
          %v1386 = vsel %vm1370, -1.0, %v1293
          %v1387 = vsel %vm1371, -1.0, %v1294
          %v1388 = vsel %vm1372, -1.0, %v1295
          %v1389 = vmin.f32 %v1373, 0.0
          %v1390 = vmin.f32 %v1374, 0.0
          %v1391 = vmin.f32 %v1375, 0.0
          %v1392 = vmin.f32 %v1376, 0.0
          %v1393 = vmin.f32 %v1377, 0.0
          %v1394 = vmin.f32 %v1378, 0.0
          %v1395 = vmin.f32 %v1379, 0.0
          %v1396 = vmin.f32 %v1380, 0.0
          %v1397 = vmin.f32 %v1381, 0.0
          %v1398 = vmin.f32 %v1382, 0.0
          %v1399 = vmin.f32 %v1383, 0.0
          %v1400 = vmin.f32 %v1384, 0.0
          %v1401 = vmin.f32 %v1385, 0.0
          %v1402 = vmin.f32 %v1386, 0.0
          %v1403 = vmin.f32 %v1387, 0.0
          %v1404 = vmin.f32 %v1388, 0.0
          %v1405 = vadd.f32 %v1389, %v1390
          %v1406 = vadd.f32 %v1405, %v1391
          %v1407 = vadd.f32 %v1406, %v1392
          %v1408 = vadd.f32 %v1407, %v1393
          %v1409 = vadd.f32 %v1408, %v1394
          %v1410 = vadd.f32 %v1409, %v1395
          %v1411 = vadd.f32 %v1410, %v1396
          %v1412 = vadd.f32 %v1411, %v1397
          %v1413 = vadd.f32 %v1412, %v1398
          %v1414 = vadd.f32 %v1413, %v1399
          %v1415 = vadd.f32 %v1414, %v1400
          %v1416 = vadd.f32 %v1415, %v1401
          %v1417 = vadd.f32 %v1416, %v1402
          %v1418 = vadd.f32 %v1417, %v1403
          %v1419 = vadd.f32 %v1418, %v1404
          %v1420 = vrot.slane %v1419, 4
          %v1421 = vadd.f32 %v1419, %v1420
          %v1422 = vrot.slane %v1421, 2
          %v1423 = vadd.f32 %v1421, %v1422
          %v1424 = vrot.slane %v1423, 1
          %v1425 = vadd.f32 %v1423, %v1424
          %v1426 = vsub.f32 0.0, %v1425
          %v1427 = vmax.f32 %v1373, %v1377
          %v1428 = vmax.f32 %v1374, %v1378
          %v1429 = vmax.f32 %v1375, %v1379
          %v1430 = vmax.f32 %v1376, %v1380
          %v1431 = vmax.f32 %v1427, %v1381
          %v1432 = vmax.f32 %v1428, %v1382
          %v1433 = vmax.f32 %v1429, %v1383
          %v1434 = vmax.f32 %v1430, %v1384
          %v1435 = vmax.f32 %v1431, %v1385
          %v1436 = vmax.f32 %v1432, %v1386
          %v1437 = vmax.f32 %v1433, %v1387
          %v1438 = vmax.f32 %v1434, %v1388
          %v1439 = vmax.f32 %v1435, %v1436
          %v1440 = vmax.f32 %v1437, %v1438
          %v1441 = vmax.f32 %v1439, %v1440
          %v1442 = vrot.slane %v1441, 4
          %v1443 = vmax.f32 %v1441, %v1442
          %v1444 = vrot.slane %v1443, 2
          %v1445 = vmax.f32 %v1443, %v1444
          %v1446 = vrot.slane %v1445, 1
          %v1447 = vmax.f32 %v1445, %v1446
          %vm1448 = vcmp.lt.f32.partialorder %v1426, 16.0
          %v1449 = vsel %vm1448, %v1447, %v1356
          %vm1450 = vcmp.eq.f32.partialorder %v1373, %v1447
          %vm1451 = vcmp.eq.f32.partialorder %v1374, %v1447
          %vm1452 = vcmp.eq.f32.partialorder %v1375, %v1447
          %vm1453 = vcmp.eq.f32.partialorder %v1376, %v1447
          %vm1454 = vcmp.eq.f32.partialorder %v1377, %v1447
          %vm1455 = vcmp.eq.f32.partialorder %v1378, %v1447
          %vm1456 = vcmp.eq.f32.partialorder %v1379, %v1447
          %vm1457 = vcmp.eq.f32.partialorder %v1380, %v1447
          %vm1458 = vcmp.eq.f32.partialorder %v1381, %v1447
          %vm1459 = vcmp.eq.f32.partialorder %v1382, %v1447
          %vm1460 = vcmp.eq.f32.partialorder %v1383, %v1447
          %vm1461 = vcmp.eq.f32.partialorder %v1384, %v1447
          %vm1462 = vcmp.eq.f32.partialorder %v1385, %v1447
          %vm1463 = vcmp.eq.f32.partialorder %v1386, %v1447
          %vm1464 = vcmp.eq.f32.partialorder %v1387, %v1447
          %vm1465 = vcmp.eq.f32.partialorder %v1388, %v1447
          %v1466 = vsel %vm1450, -1.0, %v1373
          %v1467 = vsel %vm1451, -1.0, %v1374
          %v1468 = vsel %vm1452, -1.0, %v1375
          %v1469 = vsel %vm1453, -1.0, %v1376
          %v1470 = vsel %vm1454, -1.0, %v1377
          %v1471 = vsel %vm1455, -1.0, %v1378
          %v1472 = vsel %vm1456, -1.0, %v1379
          %v1473 = vsel %vm1457, -1.0, %v1380
          %v1474 = vsel %vm1458, -1.0, %v1381
          %v1475 = vsel %vm1459, -1.0, %v1382
          %v1476 = vsel %vm1460, -1.0, %v1383
          %v1477 = vsel %vm1461, -1.0, %v1384
          %v1478 = vsel %vm1462, -1.0, %v1385
          %v1479 = vsel %vm1463, -1.0, %v1386
          %v1480 = vsel %vm1464, -1.0, %v1387
          %v1481 = vsel %vm1465, -1.0, %v1388
          %v1482 = vmin.f32 %v1466, 0.0
          %v1483 = vmin.f32 %v1467, 0.0
          %v1484 = vmin.f32 %v1468, 0.0
          %v1485 = vmin.f32 %v1469, 0.0
          %v1486 = vmin.f32 %v1470, 0.0
          %v1487 = vmin.f32 %v1471, 0.0
          %v1488 = vmin.f32 %v1472, 0.0
          %v1489 = vmin.f32 %v1473, 0.0
          %v1490 = vmin.f32 %v1474, 0.0
          %v1491 = vmin.f32 %v1475, 0.0
          %v1492 = vmin.f32 %v1476, 0.0
          %v1493 = vmin.f32 %v1477, 0.0
          %v1494 = vmin.f32 %v1478, 0.0
          %v1495 = vmin.f32 %v1479, 0.0
          %v1496 = vmin.f32 %v1480, 0.0
          %v1497 = vmin.f32 %v1481, 0.0
          %v1498 = vadd.f32 %v1482, %v1483
          %v1499 = vadd.f32 %v1498, %v1484
          %v1500 = vadd.f32 %v1499, %v1485
          %v1501 = vadd.f32 %v1500, %v1486
          %v1502 = vadd.f32 %v1501, %v1487
          %v1503 = vadd.f32 %v1502, %v1488
          %v1504 = vadd.f32 %v1503, %v1489
          %v1505 = vadd.f32 %v1504, %v1490
          %v1506 = vadd.f32 %v1505, %v1491
          %v1507 = vadd.f32 %v1506, %v1492
          %v1508 = vadd.f32 %v1507, %v1493
          %v1509 = vadd.f32 %v1508, %v1494
          %v1510 = vadd.f32 %v1509, %v1495
          %v1511 = vadd.f32 %v1510, %v1496
          %v1512 = vadd.f32 %v1511, %v1497
          %v1513 = vrot.slane %v1512, 4
          %v1514 = vadd.f32 %v1512, %v1513
          %v1515 = vrot.slane %v1514, 2
          %v1516 = vadd.f32 %v1514, %v1515
          %v1517 = vrot.slane %v1516, 1
          %v1518 = vadd.f32 %v1516, %v1517
          %v1519 = vsub.f32 0.0, %v1518
          %v1520 = vmax.f32 %v1466, %v1470
          %v1521 = vmax.f32 %v1467, %v1471
          %v1522 = vmax.f32 %v1468, %v1472
          %v1523 = vmax.f32 %v1469, %v1473
          %v1524 = vmax.f32 %v1520, %v1474
          %v1525 = vmax.f32 %v1521, %v1475
          %v1526 = vmax.f32 %v1522, %v1476
          %v1527 = vmax.f32 %v1523, %v1477
          %v1528 = vmax.f32 %v1524, %v1478
          %v1529 = vmax.f32 %v1525, %v1479
          %v1530 = vmax.f32 %v1526, %v1480
          %v1531 = vmax.f32 %v1527, %v1481
          %v1532 = vmax.f32 %v1528, %v1529
          %v1533 = vmax.f32 %v1530, %v1531
          %v1534 = vmax.f32 %v1532, %v1533
          %v1535 = vrot.slane %v1534, 4
          %v1536 = vmax.f32 %v1534, %v1535
          %v1537 = vrot.slane %v1536, 2
          %v1538 = vmax.f32 %v1536, %v1537
          %v1539 = vrot.slane %v1538, 1
          %v1540 = vmax.f32 %v1538, %v1539
          %vm1541 = vcmp.lt.f32.partialorder %v1519, 16.0
          %v1542 = vsel %vm1541, %v1540, %v1449
          %vm1543 = vcmp.eq.f32.partialorder %v1466, %v1540
          %vm1544 = vcmp.eq.f32.partialorder %v1467, %v1540
          %vm1545 = vcmp.eq.f32.partialorder %v1468, %v1540
          %vm1546 = vcmp.eq.f32.partialorder %v1469, %v1540
          %vm1547 = vcmp.eq.f32.partialorder %v1470, %v1540
          %vm1548 = vcmp.eq.f32.partialorder %v1471, %v1540
          %vm1549 = vcmp.eq.f32.partialorder %v1472, %v1540
          %vm1550 = vcmp.eq.f32.partialorder %v1473, %v1540
          %vm1551 = vcmp.eq.f32.partialorder %v1474, %v1540
          %vm1552 = vcmp.eq.f32.partialorder %v1475, %v1540
          %vm1553 = vcmp.eq.f32.partialorder %v1476, %v1540
          %vm1554 = vcmp.eq.f32.partialorder %v1477, %v1540
          %vm1555 = vcmp.eq.f32.partialorder %v1478, %v1540
          %vm1556 = vcmp.eq.f32.partialorder %v1479, %v1540
          %vm1557 = vcmp.eq.f32.partialorder %v1480, %v1540
          %vm1558 = vcmp.eq.f32.partialorder %v1481, %v1540
          %v1559 = vsel %vm1543, -1.0, %v1466
          %v1560 = vsel %vm1544, -1.0, %v1467
          %v1561 = vsel %vm1545, -1.0, %v1468
          %v1562 = vsel %vm1546, -1.0, %v1469
          %v1563 = vsel %vm1547, -1.0, %v1470
          %v1564 = vsel %vm1548, -1.0, %v1471
          %v1565 = vsel %vm1549, -1.0, %v1472
          %v1566 = vsel %vm1550, -1.0, %v1473
          %v1567 = vsel %vm1551, -1.0, %v1474
          %v1568 = vsel %vm1552, -1.0, %v1475
          %v1569 = vsel %vm1553, -1.0, %v1476
          %v1570 = vsel %vm1554, -1.0, %v1477
          %v1571 = vsel %vm1555, -1.0, %v1478
          %v1572 = vsel %vm1556, -1.0, %v1479
          %v1573 = vsel %vm1557, -1.0, %v1480
          %v1574 = vsel %vm1558, -1.0, %v1481
          %v1575 = vmin.f32 %v1559, 0.0
          %v1576 = vmin.f32 %v1560, 0.0
          %v1577 = vmin.f32 %v1561, 0.0
          %v1578 = vmin.f32 %v1562, 0.0
          %v1579 = vmin.f32 %v1563, 0.0
          %v1580 = vmin.f32 %v1564, 0.0
          %v1581 = vmin.f32 %v1565, 0.0
          %v1582 = vmin.f32 %v1566, 0.0
          %v1583 = vmin.f32 %v1567, 0.0
          %v1584 = vmin.f32 %v1568, 0.0
          %v1585 = vmin.f32 %v1569, 0.0
          %v1586 = vmin.f32 %v1570, 0.0
          %v1587 = vmin.f32 %v1571, 0.0
          %v1588 = vmin.f32 %v1572, 0.0
          %v1589 = vmin.f32 %v1573, 0.0
          %v1590 = vmin.f32 %v1574, 0.0
          %v1591 = vadd.f32 %v1575, %v1576
          %v1592 = vadd.f32 %v1591, %v1577
          %v1593 = vadd.f32 %v1592, %v1578
          %v1594 = vadd.f32 %v1593, %v1579
          %v1595 = vadd.f32 %v1594, %v1580
          %v1596 = vadd.f32 %v1595, %v1581
          %v1597 = vadd.f32 %v1596, %v1582
          %v1598 = vadd.f32 %v1597, %v1583
          %v1599 = vadd.f32 %v1598, %v1584
          %v1600 = vadd.f32 %v1599, %v1585
          %v1601 = vadd.f32 %v1600, %v1586
          %v1602 = vadd.f32 %v1601, %v1587
          %v1603 = vadd.f32 %v1602, %v1588
          %v1604 = vadd.f32 %v1603, %v1589
          %v1605 = vadd.f32 %v1604, %v1590
          %v1606 = vrot.slane %v1605, 4
          %v1607 = vadd.f32 %v1605, %v1606
          %v1608 = vrot.slane %v1607, 2
          %v1609 = vadd.f32 %v1607, %v1608
          %v1610 = vrot.slane %v1609, 1
          %v1611 = vadd.f32 %v1609, %v1610
          %v1612 = vsub.f32 0.0, %v1611
          %v1613 = vmax.f32 %v1559, %v1563
          %v1614 = vmax.f32 %v1560, %v1564
          %v1615 = vmax.f32 %v1561, %v1565
          %v1616 = vmax.f32 %v1562, %v1566
          %v1617 = vmax.f32 %v1613, %v1567
          %v1618 = vmax.f32 %v1614, %v1568
          %v1619 = vmax.f32 %v1615, %v1569
          %v1620 = vmax.f32 %v1616, %v1570
          %v1621 = vmax.f32 %v1617, %v1571
          %v1622 = vmax.f32 %v1618, %v1572
          %v1623 = vmax.f32 %v1619, %v1573
          %v1624 = vmax.f32 %v1620, %v1574
          %v1625 = vmax.f32 %v1621, %v1622
          %v1626 = vmax.f32 %v1623, %v1624
          %v1627 = vmax.f32 %v1625, %v1626
          %v1628 = vrot.slane %v1627, 4
          %v1629 = vmax.f32 %v1627, %v1628
          %v1630 = vrot.slane %v1629, 2
          %v1631 = vmax.f32 %v1629, %v1630
          %v1632 = vrot.slane %v1631, 1
          %v1633 = vmax.f32 %v1631, %v1632
          %vm1634 = vcmp.lt.f32.partialorder %v1612, 16.0
          %v1635 = vsel %vm1634, %v1633, %v1542
          %v1636 = vsub.f32 %v164, %v1635
          %v1637 = vsub.f32 %v165, %v1635
          %v1638 = vsub.f32 %v166, %v1635
          %v1639 = vsub.f32 %v167, %v1635
          %v1640 = vsub.f32 %v168, %v1635
          %v1641 = vsub.f32 %v169, %v1635
          %v1642 = vsub.f32 %v170, %v1635
          %v1643 = vsub.f32 %v171, %v1635
          %v1644 = vsub.f32 %v172, %v1635
          %v1645 = vsub.f32 %v173, %v1635
          %v1646 = vsub.f32 %v174, %v1635
          %v1647 = vsub.f32 %v175, %v1635
          %v1648 = vsub.f32 %v176, %v1635
          %v1649 = vsub.f32 %v177, %v1635
          %v1650 = vsub.f32 %v178, %v1635
          %v1651 = vsub.f32 %v179, %v1635
          %v1652 = vmax.f32 %v1636, 0.0
          %v1653 = vmax.f32 %v1637, 0.0
          %v1654 = vmax.f32 %v1638, 0.0
          %v1655 = vmax.f32 %v1639, 0.0
          %v1656 = vmax.f32 %v1640, 0.0
          %v1657 = vmax.f32 %v1641, 0.0
          %v1658 = vmax.f32 %v1642, 0.0
          %v1659 = vmax.f32 %v1643, 0.0
          %v1660 = vmax.f32 %v1644, 0.0
          %v1661 = vmax.f32 %v1645, 0.0
          %v1662 = vmax.f32 %v1646, 0.0
          %v1663 = vmax.f32 %v1647, 0.0
          %v1664 = vmax.f32 %v1648, 0.0
          %v1665 = vmax.f32 %v1649, 0.0
          %v1666 = vmax.f32 %v1650, 0.0
          %v1667 = vmax.f32 %v1651, 0.0
          %s1668 = smul.addr %s144, 8
          %s1669 = scalar_lea.vmem %s134, %s1668 [#allocation5]
          %1670 = vst [vmem:[%s1669] sm:$0xff] %v1652
          %1671 = vst [vmem:[%s1669 + $0x10] sm:$0xff] %v1653
          %1672 = vst [vmem:[%s1669 + $0x20] sm:$0xff] %v1654
          %1673 = vst [vmem:[%s1669 + $0x30] sm:$0xff] %v1655
          %1674 = vst [vmem:[%s1669 + $0x40] sm:$0xff] %v1656
          %1675 = vst [vmem:[%s1669 + $0x50] sm:$0xff] %v1657
          %1676 = vst [vmem:[%s1669 + $0x60] sm:$0xff] %v1658
          %1677 = vst [vmem:[%s1669 + $0x70] sm:$0xff] %v1659
          %1678 = vst [vmem:[%s1669 + $0x80] sm:$0xff] %v1660
          %1679 = vst [vmem:[%s1669 + $0x90] sm:$0xff] %v1661
          %1680 = vst [vmem:[%s1669 + $0xa0] sm:$0xff] %v1662
          %1681 = vst [vmem:[%s1669 + $0xb0] sm:$0xff] %v1663
          %1682 = vst [vmem:[%s1669 + $0xc0] sm:$0xff] %v1664
          %1683 = vst [vmem:[%s1669 + $0xd0] sm:$0xff] %v1665
          %1684 = vst [vmem:[%s1669 + $0xe0] sm:$0xff] %v1666
          %1685 = vst [vmem:[%s1669 + $0xf0] sm:$0xff] %v1667
        $region33: #{tpu_custom_call.1} parent=23 // loop_footer
          %s142 = sadd.s32 1, %s138
        $region34: #{tpu_custom_call.1} parent=23 // loop_footer_branch
          %137 = sbr.rel target = $region30
        $region35: #{tpu_custom_call.1} parent=23 // loop_exit
          _
        %s1686 = sand.u32 %s52, 1
        %s1687 = scalar_lea.sflag [#allocation4], %s1686
        %s1688 = sand.u32 %s52, 1
        %s1689 = smul.addr %s1688, 256
        %s1690 = scalar_lea.vmem [#allocation5], %s1689
        // Predicated region
        $region36: #{tpu_custom_call.1} parent=23 // pred_check
          %p1691 = pneg %p62
        $region37: #{tpu_custom_call.1} parent=23 // pred_check_branch
          %1693 = sbr.rel (%p1691) target = $region39
        $region38: #{tpu_custom_call.1} parent=23 // pred_region
          %s1694 = smul.u32 2, %s18
          %s1696 = ssub.s32 4096, 4096
          %1697 = vsyncadd %s1687, %s1696
          %s1698 = smul.addr %s1694, 128
          %s1699 = scalar_lea.hbm %s1, %s1698
          %s1700 = sshll.u32 %s1690, 4
          %s1701 = int_to_ptr.vmem [resolvable:$true] %s1700
          %1706 = dma.vmem_to_hbm [thread:$0]  %s1701, 4096, %s1699, %s1687, 256, 1024, 16
        $region39: #{tpu_custom_call.1} parent=23 // pred_fallthru
          _
      $region24: #{tpu_custom_call.1} parent=5 // pred_fallthru
        _
      %p1707 = scmp.le.s32.totalorder 2, %s13
      // Predicated region
      $region40: #{tpu_custom_call.1} parent=5 // pred_check
        %p1708 = pneg %p1707
      $region41: #{tpu_custom_call.1} parent=5 // pred_check_branch
        %1710 = sbr.rel (%p1708) target = $region43
      $region42: #{tpu_custom_call.1} parent=5 // pred_region
        %s1711 = ssub.s32 %s13, 2
        // Predicated region
        $region44: #{tpu_custom_call.1} parent=42 // pred_check
          %p1712 = pneg %p68
        $region45: #{tpu_custom_call.1} parent=42 // pred_check_branch
          %1714 = sbr.rel (%p1712) target = $region47
        $region46: #{tpu_custom_call.1} parent=42 // pred_region
          %s1715 = sand.u32 %s53, 1
          %s1716 = scalar_lea.sflag [#allocation4], %s1715
          %s1717 = sand.u32 %s53, 1
          %s1718 = smul.addr %s1717, 256
          %s1719 = scalar_lea.vmem [#allocation5], %s1718
          %1720 = dma.done %s1716, 4096
        $region47: #{tpu_custom_call.1} parent=42 // pred_fallthru
          _
      $region43: #{tpu_custom_call.1} parent=5 // pred_fallthru
        _
    $region6: #{tpu_custom_call.1} parent=1 // loop_footer
      %s17 = sadd.s32 1, %s13
    $region7: #{tpu_custom_call.1} parent=1 // loop_footer_branch
      %12 = sbr.rel target = $region3
    $region8: #{tpu_custom_call.1} parent=1 // loop_exit
      _
    %1721 = vsyncpa [#allocation3], 1
    %s1722 = scalar_lea.sflag [#allocation3], 1
    %1723 = vsyncpa %s1722, 1
    %1724 = vsyncpa [#allocation4], 1
    %s1725 = scalar_lea.sflag [#allocation4], 1
    %1726 = vsyncpa %s1725, 1

</llo_original>
